<compile_context>
chip_gen: v7x
topology: tpu7x:2x2x1
jax: 0.10.0
libtpu: 0.0.40
codegen_flags: <defaults>
</compile_context>

<pallas_src>
import math

import jax
import jax.numpy as jnp
from jax.experimental import pallas as pl
from jax.experimental.pallas import tpu as pltpu

LANE = 128         # lane-dense padded feature width
HALF = LANE // 2   # imag channels start at lane 64 (t=12, hidden=60 both <= 64)


def _round_up(x, m):
    return ((x + m - 1) // m) * m


def _choose_tile(m, pref=256):
    """Largest row tile <= pref (multiple of 128) that still yields >=2 grid
    steps when possible (feeds both TensorCores on v7x)."""
    mp = _round_up(max(m, 1), LANE)
    if mp <= LANE:
        return LANE
    half = (mp // 2 // LANE) * LANE
    return max(LANE, min(pref, half))


# ---------------------------------------------------------------------------
# Kernel 1: fused real+imag 3-layer GLU stack (TemporalMap.real_map / img_map)
#   per layer:  lr = h @ [Wl || Wr] + [bl || br]   (one 128x256 MXU matmul)
#               h  = lr[:, :128] * sigmoid(lr[:, 128:])
# Real weights occupy lanes [0:64), imag weights lanes [64:128) (block diag),
# so real/imag never mix; zero-padded weight columns + zero biases keep the
# padded lanes exactly 0 through all layers.
# ---------------------------------------------------------------------------
def _glu_stack_kernel(x_ref, w_ref, b_ref, o_ref):
    h = x_ref[...]                                      # (TILE_M, 128) f32
    for layer in range(w_ref.shape[0]):                 # static unroll (3)
        lr = jnp.dot(h.astype(jnp.bfloat16), w_ref[layer],
                     preferred_element_type=jnp.float32) + b_ref[layer]
        left = lr[:, :LANE]                              # vreg-aligned split
        right = lr[:, LANE:]
        gate = 1.0 / (1.0 + jnp.exp(-right))             # exact sigmoid (EUP exp)
        h = left * gate
    o_ref[...] = h


def glu_stack_pallas(x_packed, w_packed, b_packed, *, pref_tile_m=256):
    """x_packed: (M, 128) f32 with real in lanes [0:t), imag in [64:64+t)."""
    m, f = x_packed.shape
    assert f == LANE
    tile_m = _choose_tile(m, pref_tile_m)
    mp = _round_up(m, tile_m)
    xp = jnp.pad(x_packed.astype(jnp.float32), ((0, mp - m), (0, 0)))
    n_layers = w_packed.shape[0]
    out = pl.pallas_call(
        _glu_stack_kernel,
        out_shape=jax.ShapeDtypeStruct((mp, LANE), jnp.float32),
        grid=(mp // tile_m,),
        in_specs=[
            pl.BlockSpec((tile_m, LANE), lambda i: (i, 0)),
            pl.BlockSpec((n_layers, LANE, 2 * LANE), lambda i: (0, 0, 0)),
            pl.BlockSpec((n_layers, 1, 2 * LANE), lambda i: (0, 0, 0)),
        ],
        out_specs=pl.BlockSpec((tile_m, LANE), lambda i: (i, 0)),
        compiler_params=pltpu.CompilerParams(
            dimension_semantics=("parallel",)),
    )(xp, w_packed, b_packed)
    return out[:m]


# ---------------------------------------------------------------------------
# Kernel 2: fused graph convolution  out = A_w @ (X @ W) + b
# Grid (row_tile, k_tile); k is the reduction over adjacency columns / node
# rows.  XW for the current k tile is recomputed in VMEM (cheap: (tk,128)x
# (128,128)) so the (N,128) intermediate never round-trips through HBM, and
# the f32 accumulator bounds VMEM regardless of graph size (v7x: 64 MiB).
# ---------------------------------------------------------------------------
def _gcn_fused_kernel(adj_ref, x_ref, w_ref, b_ref, o_ref, acc_ref):
    k = pl.program_id(1)

    @pl.when(k == 0)
    def _():
        acc_ref[...] = jnp.zeros_like(acc_ref)

    xw = jnp.dot(x_ref[...], w_ref[...],
                 preferred_element_type=jnp.float32)            # (tk, 128) f32
    acc_ref[...] += jnp.dot(adj_ref[...], xw.astype(jnp.bfloat16),
                            preferred_element_type=jnp.float32)

    @pl.when(k == pl.num_programs(1) - 1)
    def _():
        o_ref[...] = acc_ref[...] + b_ref[...]


def gcn_pallas(x_nodes, edge_index, edge_weight, w_bf16, b_pad,
               f_in, f_out, *, pref_tile=256):
    """Single-layer weighted graph conv: out[d] = sum_{e:(s->d)} w_e*(xW)[s] + b.
    TODO(synk): the GCN class body was not given in the spec; a standard
    weighted-aggregation graph convolution is implemented."""
    n_nodes = x_nodes.shape[0]
    tile = _choose_tile(n_nodes, pref_tile)
    n_pad = _round_up(n_nodes, tile)

    xp = jnp.zeros((n_pad, LANE), jnp.float32)
    xp = xp.at[:n_nodes, :f_in].set(x_nodes.astype(jnp.float32))
    xp = xp.astype(jnp.bfloat16)

    # TODO(synk): dense weighted adjacency via data-dependent scatter is XLA
    # glue; an edge-list segment-sum Pallas kernel would be needed to scale to
    # very large graphs (avoids the O(N^2) adjacency entirely).
    src, dst = edge_index[0], edge_index[1]
    adj = jnp.zeros((n_pad, n_pad), jnp.float32).at[dst, src].add(edge_weight)
    adj = adj.astype(jnp.bfloat16)

    grid = (n_pad // tile, n_pad // tile)
    out = pl.pallas_call(
        _gcn_fused_kernel,
        out_shape=jax.ShapeDtypeStruct((n_pad, LANE), jnp.float32),
        grid=grid,
        in_specs=[
            pl.BlockSpec((tile, tile), lambda i, k: (i, k)),   # adjacency
            pl.BlockSpec((tile, LANE), lambda i, k: (k, 0)),   # node features
            pl.BlockSpec((LANE, LANE), lambda i, k: (0, 0)),   # feature weight
            pl.BlockSpec((1, LANE), lambda i, k: (0, 0)),      # bias
        ],
        out_specs=pl.BlockSpec((tile, LANE), lambda i, k: (i, 0)),
        scratch_shapes=[pltpu.VMEM((tile, LANE), jnp.float32)],
        compiler_params=pltpu.CompilerParams(
            dimension_semantics=("parallel", "arbitrary")),
    )(adj, xp, w_bf16, b_pad)
    return out[:n_nodes, :f_out]


# ---------------------------------------------------------------------------
# Graph helpers
# ---------------------------------------------------------------------------
def stack_graphs(edge_index, edge_weight, nodes_per_graph, batch):
    # TODO(synk): reference stack_graphs() was not provided with the spec;
    # standard batched-graph node-index offsetting is assumed.
    offsets = jnp.arange(batch, dtype=edge_index.dtype) * nodes_per_graph
    ei = edge_index[None, :, :] + offsets[:, None, None]     # (B, 2, E)
    ei = jnp.transpose(ei, (1, 0, 2)).reshape(2, -1)         # (2, B*E)
    ew = jnp.tile(edge_weight, batch)
    return ei, ew


# ---------------------------------------------------------------------------
# Parameter construction (deterministic; mirrors nn.Linear's U(-1/sqrt(in),..))
# Real + imag GLU stacks packed block-diagonally, left||right concatenated.
# ---------------------------------------------------------------------------
def _init_fused_glu_stack(key_real, key_img, dims):
    n = len(dims)
    w = jnp.zeros((n, LANE, 2 * LANE), jnp.float32)
    b = jnp.zeros((n, 1, 2 * LANE), jnp.float32)
    for idx, (fin, fout) in enumerate(dims):
        assert fin <= HALF and fout <= HALF
        key_real, kl_r, kbl_r, kr_r, kbr_r = jax.random.split(key_real, 5)
        key_img, kl_i, kbl_i, kr_i, kbr_i = jax.random.split(key_img, 5)
        s = 1.0 / math.sqrt(fin)
        u = lambda k, shp: jax.random.uniform(k, shp, jnp.float32, -s, s)
        # left (output lanes 0:128): real block then imag block
        w = w.at[idx, :fin, :fout].set(u(kl_r, (fin, fout)))
        w = w.at[idx, HALF:HALF + fin, HALF:HALF + fout].set(u(kl_i, (fin, fout)))
        # right / gate (output lanes 128:256)
        w = w.at[idx, :fin, LANE:LANE + fout].set(u(kr_r, (fin, fout)))
        w = w.at[idx, HALF:HALF + fin,
                 LANE + HALF:LANE + HALF + fout].set(u(kr_i, (fin, fout)))
        # biases
        b = b.at[idx, 0, :fout].set(u(kbl_r, (fout,)))
        b = b.at[idx, 0, HALF:HALF + fout].set(u(kbl_i, (fout,)))
        b = b.at[idx, 0, LANE:LANE + fout].set(u(kbr_r, (fout,)))
        b = b.at[idx, 0, LANE + HALF:LANE + HALF + fout].set(u(kbr_i, (fout,)))
    return w.astype(jnp.bfloat16), b   # bf16 weights, f32 biases


class FourierComponetPallas:
    """Pallas forward of FourierComponet (TemporalMap + graph convolution)."""

    TBUFFER = 12          # TemporalMap(12, 12, 3) hard-coded in the spec
    N_LAYER = 3
    HIDDEN_INC = 5
    HIDDEN_SIZE = 64

    def __init__(self, ndim, out_ch, key):
        self.out_ch = out_ch
        t = self.TBUFFER
        h = t * self.HIDDEN_INC
        dims = [(t, h)] + [(h, h)] * (self.N_LAYER - 2) + [(h, t)]
        k_real, k_img, k_gcn = jax.random.split(key, 3)
        self.glu_w, self.glu_b = _init_fused_glu_stack(k_real, k_img, dims)

        # GCN(ndim*hidden_size, ndim*hidden_size, 1, hidden_size)
        self.gcn_f = ndim * self.HIDDEN_SIZE
        assert self.gcn_f <= LANE, "feature padding assumes gcn_f <= 128"
        s = 1.0 / math.sqrt(self.gcn_f)
        kw, kb = jax.random.split(k_gcn)
        w = jax.random.uniform(kw, (self.gcn_f, self.gcn_f), jnp.float32, -s, s)
        b = jax.random.uniform(kb, (self.gcn_f,), jnp.float32, -s, s)
        gcn_w = jnp.zeros((LANE, LANE), jnp.float32)
        gcn_w = gcn_w.at[:self.gcn_f, :self.gcn_f].set(w)
        self.gcn_w = gcn_w.astype(jnp.bfloat16)
        self.gcn_b = jnp.zeros((1, LANE), jnp.float32).at[0, :self.gcn_f].set(b)

    def temporal_map(self, x):
        b, t, v, h = x.shape
        xt = jnp.transpose(x, (0, 3, 2, 1))              # (B, H, V, T)
        # TODO(synk): FFT/iFFT have no Pallas primitive; use XLA's FFT op.
        xf = jnp.fft.fft(xt, axis=1)                     # fft over hidden dim
        m = b * h * v
        re = jnp.real(xf).reshape(m, t)                  # (M, T)
        im = jnp.imag(xf).reshape(m, t)
        # Single pad: pack real in lanes [0:t), imag in lanes [64:64+t).
        packed = jnp.pad(jnp.stack([re, im], axis=1),
                         ((0, 0), (0, 0), (0, HALF - t))).reshape(m, LANE)
        out = glu_stack_pallas(packed, self.glu_w, self.glu_b)
        out = out.reshape(m, 2, HALF)[:, :, :t]
        spec = (out[:, 0, :] + 1j * out[:, 1, :]).reshape(b, h, v, t)
        # irfft(n=t) keeps only the first t//2+1 bins — same as torch.fft.irfft.
        xo = jnp.fft.irfft(spec, n=t, axis=-1)           # (B, H, V, T) real
        return jnp.transpose(xo, (0, 3, 2, 1))           # (B, T, V, H)

    def __call__(self, x, edge_index, edge_weight):
        batch, tbuffer, var_dim, hidden_dim = x.shape
        assert tbuffer == self.TBUFFER
        assert hidden_dim == self.gcn_f
        edge_index, edge_weight = stack_graphs(
            edge_index, edge_weight, tbuffer * var_dim, batch)
        x = self.temporal_map(x)
        x = x.reshape(batch * tbuffer * var_dim, hidden_dim)    # flatten(0, 2)
        x = gcn_pallas(x, edge_index, edge_weight, self.gcn_w, self.gcn_b,
                       f_in=hidden_dim, f_out=self.gcn_f)
        return x.reshape(batch, tbuffer, -1, self.gcn_f)        # unflatten(0,.)


if __name__ == "__main__":
    root = jax.random.PRNGKey(0)
    kx, kw, ke = jax.random.split(root, 3)

    batch, tbuffer, var_dim, hidden_dim = 2, 12, 4, 64   # hidden = ndim*64, ndim=1
    x = jax.random.normal(kx, (batch, tbuffer, var_dim, hidden_dim), jnp.float32)

    # Deterministic per-graph ring over tbuffer*var_dim nodes.
    n_nodes = tbuffer * var_dim
    src = jnp.arange(n_nodes, dtype=jnp.int32)
    dst = (src + 1) % n_nodes
    edge_index = jnp.stack([src, dst], axis=0)           # (2, 48)
    edge_weight = jax.random.uniform(ke, (n_nodes,), jnp.float32)

    model = FourierComponetPallas(ndim=1, out_ch=hidden_dim, key=kw)
    out = model(x, edge_index, edge_weight)
    out = jax.block_until_ready(out)

    assert out.shape == (batch, tbuffer, var_dim, hidden_dim)
    assert bool(jnp.all(jnp.isfinite(out)))
    print("KERNEL_OK")
</pallas_src>

<mosaic_0001>
module attributes {stable_mosaic.version = 11 : i64} {
  func.func @_glu_stack_kernel(%arg0: i32, %arg1: memref<256x128xf32, #tpu.memory_space<vmem>>, %arg2: memref<3x128x256xbf16, #tpu.memory_space<vmem>>, %arg3: memref<3x1x256xf32, #tpu.memory_space<vmem>>, %arg4: memref<256x128xf32, #tpu.memory_space<vmem>>) attributes {dimension_semantics = [#tpu.dimension_semantics<parallel>], iteration_bounds = array<i64: 2>, scalar_prefetch = 0 : i64, scratch_operands = 0 : i64, tpu.core_type = #tpu.core_type<tc>, window_params = [{transform_indices = @transform_0, window_bounds = array<i64: 256, 128>}, {pipeline_mode = #tpu.pipeline_mode<synchronous>, transform_indices = @transform_1, window_bounds = array<i64: 3, 128, 256>}, {pipeline_mode = #tpu.pipeline_mode<synchronous>, transform_indices = @transform_2, window_bounds = array<i64: 3, 1, 256>}, {transform_indices = @transform_3, window_bounds = array<i64: 256, 128>}]} {
    %c0 = arith.constant 0 : index
    %c0_0 = arith.constant 0 : index
    %0 = vector.load %arg1[%c0, %c0_0] : memref<256x128xf32, #tpu.memory_space<vmem>>, vector<256x128xf32>
    %1 = arith.truncf %0 : vector<256x128xf32> to vector<256x128xbf16>
    %c0_1 = arith.constant 0 : index
    %c0_2 = arith.constant 0 : index
    %c0_3 = arith.constant 0 : index
    %2 = vector.load %arg2[%c0_1, %c0_2, %c0_3] : memref<3x128x256xbf16, #tpu.memory_space<vmem>>, vector<1x128x256xbf16>
    %3 = vector.shape_cast %2 : vector<1x128x256xbf16> to vector<128x256xbf16>
    %cst = arith.constant dense<0.000000e+00> : vector<256x256xf32>
    %4 = tpu.matmul %1, %3, %cst {dimension_numbers = #tpu.dot_dimension_numbers<[1], [0], [0], [1], [0, 0, 1, 1], [], []>} : vector<256x128xbf16>, vector<128x256xbf16>, vector<256x256xf32> -> vector<256x256xf32>
    %c0_4 = arith.constant 0 : index
    %c0_5 = arith.constant 0 : index
    %c0_6 = arith.constant 0 : index
    %5 = vector.load %arg3[%c0_4, %c0_5, %c0_6] : memref<3x1x256xf32, #tpu.memory_space<vmem>>, vector<1x1x256xf32>
    %6 = vector.shape_cast %5 : vector<1x1x256xf32> to vector<1x256xf32>
    %7 = vector.broadcast %6 : vector<1x256xf32> to vector<256x256xf32>
    %8 = arith.addf %4, %7 : vector<256x256xf32>
    %9 = vector.extract_strided_slice %8 {offsets = [0, 0], sizes = [256, 128], strides = [1, 1]} : vector<256x256xf32> to vector<256x128xf32>
    %10 = vector.extract_strided_slice %8 {offsets = [0, 128], sizes = [256, 128], strides = [1, 1]} : vector<256x256xf32> to vector<256x128xf32>
    %cst_7 = arith.constant 0.000000e+00 : f32
    %11 = vector.broadcast %cst_7 : f32 to vector<256x128xf32>
    %12 = arith.subf %11, %10 : vector<256x128xf32>
    %13 = math.exp %12 : vector<256x128xf32>
    %cst_8 = arith.constant 1.000000e+00 : f32
    %14 = vector.broadcast %cst_8 : f32 to vector<256x128xf32>
    %15 = arith.addf %14, %13 : vector<256x128xf32>
    %cst_9 = arith.constant 1.000000e+00 : f32
    %16 = vector.broadcast %cst_9 : f32 to vector<256x128xf32>
    %17 = arith.divf %16, %15 : vector<256x128xf32>
    %18 = arith.mulf %9, %17 : vector<256x128xf32>
    %19 = arith.truncf %18 : vector<256x128xf32> to vector<256x128xbf16>
    %c1 = arith.constant 1 : index
    %c0_10 = arith.constant 0 : index
    %c0_11 = arith.constant 0 : index
    %20 = vector.load %arg2[%c1, %c0_10, %c0_11] : memref<3x128x256xbf16, #tpu.memory_space<vmem>>, vector<1x128x256xbf16>
    %21 = vector.shape_cast %20 : vector<1x128x256xbf16> to vector<128x256xbf16>
    %cst_12 = arith.constant dense<0.000000e+00> : vector<256x256xf32>
    %22 = tpu.matmul %19, %21, %cst_12 {dimension_numbers = #tpu.dot_dimension_numbers<[1], [0], [0], [1], [0, 0, 1, 1], [], []>} : vector<256x128xbf16>, vector<128x256xbf16>, vector<256x256xf32> -> vector<256x256xf32>
    %c1_13 = arith.constant 1 : index
    %c0_14 = arith.constant 0 : index
    %c0_15 = arith.constant 0 : index
    %23 = vector.load %arg3[%c1_13, %c0_14, %c0_15] : memref<3x1x256xf32, #tpu.memory_space<vmem>>, vector<1x1x256xf32>
    %24 = vector.shape_cast %23 : vector<1x1x256xf32> to vector<1x256xf32>
    %25 = vector.broadcast %24 : vector<1x256xf32> to vector<256x256xf32>
    %26 = arith.addf %22, %25 : vector<256x256xf32>
    %27 = vector.extract_strided_slice %26 {offsets = [0, 0], sizes = [256, 128], strides = [1, 1]} : vector<256x256xf32> to vector<256x128xf32>
    %28 = vector.extract_strided_slice %26 {offsets = [0, 128], sizes = [256, 128], strides = [1, 1]} : vector<256x256xf32> to vector<256x128xf32>
    %cst_16 = arith.constant 0.000000e+00 : f32
    %29 = vector.broadcast %cst_16 : f32 to vector<256x128xf32>
    %30 = arith.subf %29, %28 : vector<256x128xf32>
    %31 = math.exp %30 : vector<256x128xf32>
    %cst_17 = arith.constant 1.000000e+00 : f32
    %32 = vector.broadcast %cst_17 : f32 to vector<256x128xf32>
    %33 = arith.addf %32, %31 : vector<256x128xf32>
    %cst_18 = arith.constant 1.000000e+00 : f32
    %34 = vector.broadcast %cst_18 : f32 to vector<256x128xf32>
    %35 = arith.divf %34, %33 : vector<256x128xf32>
    %36 = arith.mulf %27, %35 : vector<256x128xf32>
    %37 = arith.truncf %36 : vector<256x128xf32> to vector<256x128xbf16>
    %c2 = arith.constant 2 : index
    %c0_19 = arith.constant 0 : index
    %c0_20 = arith.constant 0 : index
    %38 = vector.load %arg2[%c2, %c0_19, %c0_20] : memref<3x128x256xbf16, #tpu.memory_space<vmem>>, vector<1x128x256xbf16>
    %39 = vector.shape_cast %38 : vector<1x128x256xbf16> to vector<128x256xbf16>
    %cst_21 = arith.constant dense<0.000000e+00> : vector<256x256xf32>
    %40 = tpu.matmul %37, %39, %cst_21 {dimension_numbers = #tpu.dot_dimension_numbers<[1], [0], [0], [1], [0, 0, 1, 1], [], []>} : vector<256x128xbf16>, vector<128x256xbf16>, vector<256x256xf32> -> vector<256x256xf32>
    %c2_22 = arith.constant 2 : index
    %c0_23 = arith.constant 0 : index
    %c0_24 = arith.constant 0 : index
    %41 = vector.load %arg3[%c2_22, %c0_23, %c0_24] : memref<3x1x256xf32, #tpu.memory_space<vmem>>, vector<1x1x256xf32>
    %42 = vector.shape_cast %41 : vector<1x1x256xf32> to vector<1x256xf32>
    %43 = vector.broadcast %42 : vector<1x256xf32> to vector<256x256xf32>
    %44 = arith.addf %40, %43 : vector<256x256xf32>
    %45 = vector.extract_strided_slice %44 {offsets = [0, 0], sizes = [256, 128], strides = [1, 1]} : vector<256x256xf32> to vector<256x128xf32>
    %46 = vector.extract_strided_slice %44 {offsets = [0, 128], sizes = [256, 128], strides = [1, 1]} : vector<256x256xf32> to vector<256x128xf32>
    %cst_25 = arith.constant 0.000000e+00 : f32
    %47 = vector.broadcast %cst_25 : f32 to vector<256x128xf32>
    %48 = arith.subf %47, %46 : vector<256x128xf32>
    %49 = math.exp %48 : vector<256x128xf32>
    %cst_26 = arith.constant 1.000000e+00 : f32
    %50 = vector.broadcast %cst_26 : f32 to vector<256x128xf32>
    %51 = arith.addf %50, %49 : vector<256x128xf32>
    %cst_27 = arith.constant 1.000000e+00 : f32
    %52 = vector.broadcast %cst_27 : f32 to vector<256x128xf32>
    %53 = arith.divf %52, %51 : vector<256x128xf32>
    %54 = arith.mulf %45, %53 : vector<256x128xf32>
    %c0_28 = arith.constant 0 : index
    %c0_29 = arith.constant 0 : index
    %55 = vector.load %arg4[%c0_28, %c0_29] : memref<256x128xf32, #tpu.memory_space<vmem>>, vector<256x128xf32>
    tpu.vector_store %arg4[%c0_28, %c0_29], %54 {strides = array<i32>} : memref<256x128xf32, #tpu.memory_space<vmem>>, vector<256x128xf32>,
    return
  }
  func.func @transform_0(%arg0: i32) -> (i32, i32) {
    %c0_i32 = arith.constant 0 : i32
    %c0_i32_0 = arith.constant 0 : i32
    return %arg0, %c0_i32 : i32, i32
  }
  func.func @transform_1(%arg0: i32) -> (i32, i32, i32) {
    %c0_i32 = arith.constant 0 : i32
    %c0_i32_0 = arith.constant 0 : i32
    %c0_i32_1 = arith.constant 0 : i32
    %c0_i32_2 = arith.constant 0 : i32
    return %c0_i32, %c0_i32_0, %c0_i32_1 : i32, i32, i32
  }
  func.func @transform_2(%arg0: i32) -> (i32, i32, i32) {
    %c0_i32 = arith.constant 0 : i32
    %c0_i32_0 = arith.constant 0 : i32
    %c0_i32_1 = arith.constant 0 : i32
    %c0_i32_2 = arith.constant 0 : i32
    return %c0_i32, %c0_i32_0, %c0_i32_1 : i32, i32, i32
  }
  func.func @transform_3(%arg0: i32) -> (i32, i32) {
    %c0_i32 = arith.constant 0 : i32
    %c0_i32_0 = arith.constant 0 : i32
    return %arg0, %c0_i32 : i32, i32
  }
}

</mosaic_0001>

<llo_original>
// kernel: tpu_custom_call.1
$region0: #{tpu_custom_call.1}
  #allocation0 [shape = 'u32[]', space=smem, size = 0x4, offset = 0x4, fixed_abs, tag = 'smem constant byte address 0x4 - core index']
  #allocation1 [shape = 'u32[144,128]{1,0:T(1,128)}', space=vmem, size = 0x12000, scoped, tag = 'internal scratch']
  %s0 = inlined_call_operand.hbm [shape: f32[512,128], index: 0, kind: input, shape index: {}]
  %s1 = inlined_call_operand.hbm [shape: bf16[3,128,256], index: 1, kind: input, shape index: {}]
  %s2 = inlined_call_operand.vmem [shape: f32[3,1,256], index: 2, kind: input, shape index: {}]
  %s3 = inlined_call_operand.hbm [shape: f32[512,128], index: 3, kind: output, shape index: {}]
  %s4 = sld [smem:[#allocation0]]
  $region53: #{tpu_custom_call.1} parent=0
    _
  %s6 = ssub.s32 1, %s4
  %s7 = scalar_select 0, %s6, %s4
  $region1: #{tpu_custom_call.1} parent=0
    #allocation2 [shape = 'u8[262144]{0}', space=vmem, size = 0x40000, scoped, tag = 'input window, operand 0']
    #allocation3 [shape = 's32[2]{0}', space=sflag, size = 0x8, scoped, tag = 'scoped memory for tpu_custom_call.1']
    #allocation4 [shape = 's32[2]{0}', space=sflag, size = 0x8, scoped, tag = 'scoped memory for tpu_custom_call.1']
    #allocation5 [shape = 'u8[196608]{0}', space=vmem, size = 0x30000, scoped, tag = 'input window, operand 1, single buffered']
    #allocation6 [shape = 's32[1]{0}', space=sflag, size = 0x4, scoped, tag = 'scoped memory for tpu_custom_call.1']
    #allocation7 [shape = 'u8[262144]{0}', space=vmem, size = 0x40000, scoped, tag = 'output window, operand 0']
    %8 = vsyncpa [#allocation3], 0
    %s9 = scalar_lea.sflag [#allocation3], 1
    %10 = vsyncpa %s9, 0
    %11 = vsyncpa [#allocation6], 0
    %12 = vsyncpa [#allocation4], 0
    %s13 = scalar_lea.sflag [#allocation4], 1
    %14 = vsyncpa %s13, 0
    loop: start=0, step=1, limit=4
    $region2: #{tpu_custom_call.1} parent=1 // loop_pre_header
      _
    $region3: #{tpu_custom_call.1} parent=1 // loop_header
      %s16 = sphi 0, %s20
      %p17 = scmp.ge.s32.totalorder %s16, 4
      %s26 = sphi 0, %s28
      %s29 = sphi 0, %s26
      %s30 = sphi 0, %s29
      %s46 = sphi 0, %s30
      %s50 = sphi 0, %s50
      %s52 = sphi 0, %s50
      %s53 = sphi 0, %s52
      %s67 = sphi 0, %s53
      %s71 = sphi 0, %s71
      %s73 = sphi 0, %s71
      %s74 = sphi 0, %s73
      %s88 = sphi 0, %s74
      %s94 = sphi 0, %s96
      %s97 = sphi 0, %s94
      %s98 = sphi 0, %s97
      %s114 = sphi 0, %s98
    $region4: #{tpu_custom_call.1} parent=1 // loop_header_branch
      %19 = sbr.rel (%p17) target = $region8
    $region5: #{tpu_custom_call.1} parent=1 // loop_body
      %s21 = ssub.s32 %s16, 1
      %s22 = ssub.s32 %s16, 2
      %s23 = sadd.s32 %s16, 1
      %s24 = ssub.s32 %s16, %s23
      %p25 = scmp.eq.s32.totalorder %s24, 0
      %s27 = sadd.s32 %s26, 1
      %s28 = scalar_select %p25, %s26, %s27
      %p31 = pneg %p25
      %p32 = scmp.eq.s32.totalorder %s16, 1
      %p33 = por %p31, %p32
      %p34 = scmp.ne.s32.totalorder %s26, %s29
      %p35 = scmp.eq.s32.totalorder %s16, 0
      %p36 = por %p34, %p35
      %p37 = scmp.ne.s32.totalorder %s26, %s29
      %p38 = scmp.eq.s32.totalorder %s21, 1
      %p39 = por %p37, %p38
      %p40 = scmp.ne.s32.totalorder %s29, %s30
      %p41 = scmp.eq.s32.totalorder %s21, 0
      %p42 = por %p40, %p41
      %p43 = scmp.ne.s32.totalorder %s29, %s30
      %p44 = scmp.eq.s32.totalorder %s22, 1
      %p45 = por %p43, %p44
      %p47 = scmp.ne.s32.totalorder %s30, %s46
      %p48 = scmp.eq.s32.totalorder %s22, 0
      %p49 = por %p47, %p48
      %s51 = sadd.s32 %s50, 1
      %p54 = scmp.eq.s32.totalorder %s16, 1
      %p55 = scmp.ne.s32.totalorder %s50, %s52
      %p56 = scmp.eq.s32.totalorder %s16, 0
      %p57 = por %p55, %p56
      %p58 = scmp.ne.s32.totalorder %s50, %s52
      %p59 = scmp.eq.s32.totalorder %s21, 1
      %p60 = por %p58, %p59
      %p61 = scmp.ne.s32.totalorder %s52, %s53
      %p62 = scmp.eq.s32.totalorder %s21, 0
      %p63 = por %p61, %p62
      %p64 = scmp.ne.s32.totalorder %s52, %s53
      %p65 = scmp.eq.s32.totalorder %s22, 1
      %p66 = por %p64, %p65
      %p68 = scmp.ne.s32.totalorder %s53, %s67
      %p69 = scmp.eq.s32.totalorder %s22, 0
      %p70 = por %p68, %p69
      %s72 = sadd.s32 %s71, 1
      %p75 = scmp.eq.s32.totalorder %s16, 1
      %p76 = scmp.ne.s32.totalorder %s71, %s73
      %p77 = scmp.eq.s32.totalorder %s16, 0
      %p78 = por %p76, %p77
      %p79 = scmp.ne.s32.totalorder %s71, %s73
      %p80 = scmp.eq.s32.totalorder %s21, 1
      %p81 = por %p79, %p80
      %p82 = scmp.ne.s32.totalorder %s73, %s74
      %p83 = scmp.eq.s32.totalorder %s21, 0
      %p84 = por %p82, %p83
      %p85 = scmp.ne.s32.totalorder %s73, %s74
      %p86 = scmp.eq.s32.totalorder %s22, 1
      %p87 = por %p85, %p86
      %p89 = scmp.ne.s32.totalorder %s74, %s88
      %p90 = scmp.eq.s32.totalorder %s22, 0
      %p91 = por %p89, %p90
      %s92 = ssub.s32 %s16, %s23
      %p93 = scmp.eq.s32.totalorder %s92, 0
      %s95 = sadd.s32 %s94, 1
      %s96 = scalar_select %p93, %s94, %s95
      %p99 = pneg %p93
      %p100 = scmp.eq.s32.totalorder %s16, 1
      %p101 = por %p99, %p100
      %p102 = scmp.ne.s32.totalorder %s94, %s97
      %p103 = scmp.eq.s32.totalorder %s16, 0
      %p104 = por %p102, %p103
      %p105 = scmp.ne.s32.totalorder %s94, %s97
      %p106 = scmp.eq.s32.totalorder %s21, 1
      %p107 = por %p105, %p106
      %p108 = scmp.ne.s32.totalorder %s97, %s98
      %p109 = scmp.eq.s32.totalorder %s21, 0
      %p110 = por %p108, %p109
      %p111 = scmp.ne.s32.totalorder %s97, %s98
      %p112 = scmp.eq.s32.totalorder %s22, 1
      %p113 = por %p111, %p112
      %p115 = scmp.ne.s32.totalorder %s98, %s114
      %p116 = scmp.eq.s32.totalorder %s22, 0
      %p117 = por %p115, %p116
      %p118 = scmp.le.s32.totalorder 1, %s16
      %p119 = scmp.lt.s32.totalorder %s16, 3
      %p120 = pnand %p118, %p119
      %p121 = pneg %p120
      // Predicated region
      $region9: #{tpu_custom_call.1} parent=5 // pred_check
        _
      $region10: #{tpu_custom_call.1} parent=5 // pred_check_branch
        %123 = sbr.rel (%p120) target = $region12
      $region11: #{tpu_custom_call.1} parent=5 // pred_region
        %s124 = ssub.s32 %s16, 1
        // Predicated region
        $region13: #{tpu_custom_call.1} parent=11 // pred_check
          %p125 = pneg %p63
        $region14: #{tpu_custom_call.1} parent=11 // pred_check_branch
          %127 = sbr.rel (%p125) target = $region16
        $region15: #{tpu_custom_call.1} parent=11 // pred_region
          %s129 = ssub.s32 6144, 6144
          %130 = vsyncadd [#allocation6], %s129
          %s131 = sshll.u32 [#allocation5], 4
          %s132 = int_to_ptr.vmem [resolvable:$true] %s131
          %137 = dma.hbm_to_vmem [thread:$0]  %s1, 6144, %s132, [#allocation6], 128, 128, 8
        $region16: #{tpu_custom_call.1} parent=11 // pred_fallthru
          _
        // Predicated region
        $region17: #{tpu_custom_call.1} parent=11 // pred_check
          %p138 = pneg %p84
        $region18: #{tpu_custom_call.1} parent=11 // pred_check_branch
          %140 = sbr.rel (%p138) target = $region20
        $region19: #{tpu_custom_call.1} parent=11 // pred_region
          _
        $region20: #{tpu_custom_call.1} parent=11 // pred_fallthru
          _
      $region12: #{tpu_custom_call.1} parent=5 // pred_fallthru
        _
      %p141 = scmp.lt.s32.totalorder %s16, 2
      // Predicated region
      $region21: #{tpu_custom_call.1} parent=5 // pred_check
        %p142 = pneg %p141
      $region22: #{tpu_custom_call.1} parent=5 // pred_check_branch
        %144 = sbr.rel (%p142) target = $region24
      $region23: #{tpu_custom_call.1} parent=5 // pred_region
        // Predicated region
        $region25: #{tpu_custom_call.1} parent=23 // pred_check
          %p145 = pneg %p36
        $region26: #{tpu_custom_call.1} parent=23 // pred_check_branch
          %147 = sbr.rel (%p145) target = $region28
        $region27: #{tpu_custom_call.1} parent=23 // pred_region
          %s148 = sand.u32 %s26, 1
          %s149 = scalar_lea.sflag [#allocation3], %s148
          %s150 = sand.u32 %s26, 1
          %s151 = smul.addr %s150, 256
          %s152 = scalar_lea.vmem [#allocation2], %s151
          %s153 = smul.u32 32, %s16
          %s155 = ssub.s32 4096, 4096
          %156 = vsyncadd %s149, %s155
          %s157 = smul.addr %s153, 128
          %s158 = scalar_lea.hbm %s0, %s157
          %s159 = sshll.u32 %s152, 4
          %s160 = int_to_ptr.vmem [resolvable:$true] %s159
          %165 = dma.hbm_to_vmem [thread:$0]  %s158, 4096, %s160, %s149, 128, 128, 8
        $region28: #{tpu_custom_call.1} parent=23 // pred_fallthru
          _
      $region24: #{tpu_custom_call.1} parent=5 // pred_fallthru
        _
      %p166 = scmp.le.s32.totalorder 1, %s16
      %p167 = scmp.lt.s32.totalorder %s16, 3
      %p168 = pnand %p166, %p167
      %p169 = pneg %p168
      // Predicated region
      $region29: #{tpu_custom_call.1} parent=5 // pred_check
        _
      $region30: #{tpu_custom_call.1} parent=5 // pred_check_branch
        %171 = sbr.rel (%p168) target = $region32
      $region31: #{tpu_custom_call.1} parent=5 // pred_region
        %s172 = ssub.s32 %s16, 1
        %s173 = sand.u32 %s29, 1
        %s174 = scalar_lea.sflag [#allocation3], %s173
        %s175 = sand.u32 %s29, 1
        %s176 = smul.addr %s175, 256
        %s177 = scalar_lea.vmem [#allocation2], %s176
        // Predicated region
        $region33: #{tpu_custom_call.1} parent=31 // pred_check
          %p178 = pneg %p42
        $region34: #{tpu_custom_call.1} parent=31 // pred_check_branch
          %180 = sbr.rel (%p178) target = $region36
        $region35: #{tpu_custom_call.1} parent=31 // pred_region
          %181 = dma.done %s174, 4096
        $region36: #{tpu_custom_call.1} parent=31 // pred_fallthru
          _
        // Predicated region
        $region37: #{tpu_custom_call.1} parent=31 // pred_check
          %p182 = pneg %p63
        $region38: #{tpu_custom_call.1} parent=31 // pred_check_branch
          %184 = sbr.rel (%p182) target = $region40
        $region39: #{tpu_custom_call.1} parent=31 // pred_region
          %185 = dma.done [#allocation6], 6144
        $region40: #{tpu_custom_call.1} parent=31 // pred_fallthru
          _
        %s186 = sand.u32 %s29, 1
        %s187 = scalar_lea.sflag [#allocation3], %s186
        %s188 = sand.u32 %s29, 1
        %s189 = smul.addr %s188, 256
        %s190 = scalar_lea.vmem [#allocation2], %s189
        %p191 = pneg %p42
        %p192 = pneg %p39
        %p193 = pneg %p63
        %p194 = pneg %p60
        %p195 = pneg %p84
        %p196 = pneg %p81
        %p197 = pneg %p110
        %p198 = pneg %p107
        %s199 = sand.u32 %s97, 1
        %s200 = scalar_lea.sflag [#allocation4], %s199
        %s201 = sand.u32 %s97, 1
        %s202 = smul.addr %s201, 256
        %s203 = scalar_lea.vmem [#allocation7], %s202
        %s204 = smul.u32 32, %s21
        %s205 = smul.u32 32, %s21
        %v207 = vld [vmem:[%s177] sm:$0xff]
        %v208 = vld [vmem:[%s177 + $0x8] sm:$0xff]
        %v209 = vld [vmem:[%s177 + $0x10] sm:$0xff]
        %v210 = vld [vmem:[%s177 + $0x18] sm:$0xff]
        %v211 = vld [vmem:[%s177 + $0x20] sm:$0xff]
        %v212 = vld [vmem:[%s177 + $0x28] sm:$0xff]
        %v213 = vld [vmem:[%s177 + $0x30] sm:$0xff]
        %v214 = vld [vmem:[%s177 + $0x38] sm:$0xff]
        %v215 = vld [vmem:[%s177 + $0x40] sm:$0xff]
        %v216 = vld [vmem:[%s177 + $0x48] sm:$0xff]
        %v217 = vld [vmem:[%s177 + $0x50] sm:$0xff]
        %v218 = vld [vmem:[%s177 + $0x58] sm:$0xff]
        %v219 = vld [vmem:[%s177 + $0x60] sm:$0xff]
        %v220 = vld [vmem:[%s177 + $0x68] sm:$0xff]
        %v221 = vld [vmem:[%s177 + $0x70] sm:$0xff]
        %v222 = vld [vmem:[%s177 + $0x78] sm:$0xff]
        %v223 = vld [vmem:[%s177 + $0x80] sm:$0xff]
        %v224 = vld [vmem:[%s177 + $0x88] sm:$0xff]
        %v225 = vld [vmem:[%s177 + $0x90] sm:$0xff]
        %v226 = vld [vmem:[%s177 + $0x98] sm:$0xff]
        %v227 = vld [vmem:[%s177 + $0xa0] sm:$0xff]
        %v228 = vld [vmem:[%s177 + $0xa8] sm:$0xff]
        %v229 = vld [vmem:[%s177 + $0xb0] sm:$0xff]
        %v230 = vld [vmem:[%s177 + $0xb8] sm:$0xff]
        %v231 = vld [vmem:[%s177 + $0xc0] sm:$0xff]
        %v232 = vld [vmem:[%s177 + $0xc8] sm:$0xff]
        %v233 = vld [vmem:[%s177 + $0xd0] sm:$0xff]
        %v234 = vld [vmem:[%s177 + $0xd8] sm:$0xff]
        %v235 = vld [vmem:[%s177 + $0xe0] sm:$0xff]
        %v236 = vld [vmem:[%s177 + $0xe8] sm:$0xff]
        %v237 = vld [vmem:[%s177 + $0xf0] sm:$0xff]
        %v238 = vld [vmem:[%s177 + $0xf8] sm:$0xff]
        %v239 = vpack.c.bf16 %v208, %v207
        %v240 = vpack.c.bf16 %v210, %v209
        %v241 = vpack.c.bf16 %v212, %v211
        %v242 = vpack.c.bf16 %v214, %v213
        %v243 = vpack.c.bf16 %v216, %v215
        %v244 = vpack.c.bf16 %v218, %v217
        %v245 = vpack.c.bf16 %v220, %v219
        %v246 = vpack.c.bf16 %v222, %v221
        %v247 = vpack.c.bf16 %v224, %v223
        %v248 = vpack.c.bf16 %v226, %v225
        %v249 = vpack.c.bf16 %v228, %v227
        %v250 = vpack.c.bf16 %v230, %v229
        %v251 = vpack.c.bf16 %v232, %v231
        %v252 = vpack.c.bf16 %v234, %v233
        %v253 = vpack.c.bf16 %v236, %v235
        %v254 = vpack.c.bf16 %v238, %v237
        %v255 = vld [vmem:[#allocation5] sm:$0xff]
        %v256 = vld [vmem:[#allocation5 + $0x8] sm:$0xff]
        %v257 = vld [vmem:[#allocation5 + $0x10] sm:$0xff]
        %v258 = vld [vmem:[#allocation5 + $0x18] sm:$0xff]
        %v259 = vld [vmem:[#allocation5 + $0x20] sm:$0xff]
        %v260 = vld [vmem:[#allocation5 + $0x28] sm:$0xff]
        %v261 = vld [vmem:[#allocation5 + $0x30] sm:$0xff]
        %v262 = vld [vmem:[#allocation5 + $0x38] sm:$0xff]
        %v263 = vld [vmem:[#allocation5 + $0x40] sm:$0xff]
        %v264 = vld [vmem:[#allocation5 + $0x48] sm:$0xff]
        %v265 = vld [vmem:[#allocation5 + $0x50] sm:$0xff]
        %v266 = vld [vmem:[#allocation5 + $0x58] sm:$0xff]
        %v267 = vld [vmem:[#allocation5 + $0x60] sm:$0xff]
        %v268 = vld [vmem:[#allocation5 + $0x68] sm:$0xff]
        %v269 = vld [vmem:[#allocation5 + $0x70] sm:$0xff]
        %v270 = vld [vmem:[#allocation5 + $0x78] sm:$0xff]
        %v271 = vld [vmem:[%s2] sm:$0x3]
        %v273 = vlaneseq
        %v274 = vshrl.u32 %v273, 7
        %v275 = vsub.s32 0, %v274
        %v276 = vrot.slane %v271, %v275
        %v277 = vlaneseq
        %v278 = vshrl.u32 %v277, 7
        %v279 = vsub.s32 1, %v278
        %v280 = vrot.slane %v271, %v279
        %v299 = vunpack.c.l.b16 %v255
        %v300 = vunpack.c.h.b16 %v255
        %v301 = vunpack.c.l.b16 %v256
        %v302 = vunpack.c.h.b16 %v256
        %v303 = vunpack.c.l.b16 %v257
        %v304 = vunpack.c.h.b16 %v257
        %v305 = vunpack.c.l.b16 %v258
        %v306 = vunpack.c.h.b16 %v258
        %v307 = vunpack.c.l.b16 %v259
        %v308 = vunpack.c.h.b16 %v259
        %v309 = vunpack.c.l.b16 %v260
        %v310 = vunpack.c.h.b16 %v260
        %v311 = vunpack.c.l.b16 %v261
        %v312 = vunpack.c.h.b16 %v261
        %v313 = vunpack.c.l.b16 %v262
        %v314 = vunpack.c.h.b16 %v262
        %v315 = vunpack.c.l.b16 %v263
        %v316 = vunpack.c.h.b16 %v263
        %v317 = vunpack.c.l.b16 %v264
        %v318 = vunpack.c.h.b16 %v264
        %v319 = vunpack.c.l.b16 %v265
        %v320 = vunpack.c.h.b16 %v265
        %v321 = vunpack.c.l.b16 %v266
        %v322 = vunpack.c.h.b16 %v266
        %v323 = vunpack.c.l.b16 %v267
        %v324 = vunpack.c.h.b16 %v267
        %v325 = vunpack.c.l.b16 %v268
        %v326 = vunpack.c.h.b16 %v268
        %v327 = vunpack.c.l.b16 %v269
        %v328 = vunpack.c.h.b16 %v269
        %v329 = vunpack.c.l.b16 %v270
        %v330 = vunpack.c.h.b16 %v270
        %v331 = vpack.c.b16 %v301, %v299
        %v332 = vpack.c.b16 %v302, %v300
        %v333 = vpack.c.b16 %v305, %v303
        %v334 = vpack.c.b16 %v306, %v304
        %v335 = vpack.c.b16 %v309, %v307
        %v336 = vpack.c.b16 %v310, %v308
        %v337 = vpack.c.b16 %v313, %v311
        %v338 = vpack.c.b16 %v314, %v312
        %v339 = vpack.c.b16 %v317, %v315
        %v340 = vpack.c.b16 %v318, %v316
        %v341 = vpack.c.b16 %v321, %v319
        %v342 = vpack.c.b16 %v322, %v320
        %v343 = vpack.c.b16 %v325, %v323
        %v344 = vpack.c.b16 %v326, %v324
        %v345 = vpack.c.b16 %v329, %v327
        %v346 = vpack.c.b16 %v330, %v328
        %363 = vmatprep.subr.bf16.mxu0 %v332
        %364 = vmatpush1.bf16.msra.mxu0 %v331
        %365 = vmatprep.subr.bf16.mxu0 %v334
        %366 = vmatpush1.bf16.msra.mxu0 %v333
        %367 = vmatprep.subr.bf16.mxu0 %v336
        %368 = vmatpush1.bf16.msra.mxu0 %v335
        %369 = vmatprep.subr.bf16.mxu0 %v338
        %370 = vmatpush1.bf16.msra.mxu0 %v337
        %371 = vmatprep.subr.bf16.mxu0 %v340
        %372 = vmatpush1.bf16.msra.mxu0 %v339
        %373 = vmatprep.subr.bf16.mxu0 %v342
        %374 = vmatpush1.bf16.msra.mxu0 %v341
        %375 = vmatprep.subr.bf16.mxu0 %v344
        %376 = vmatpush1.bf16.msra.mxu0 %v343
        %377 = vmatprep.subr.bf16.mxu0 %v346
        %378 = vmatpush1.bf16.msra.mxu0 %v345
        %379 = vmatprep.subr.bf16.mxu0 0
        %380 = vmatpush1.bf16.msra.mxu0 0
        %381 = vmatprep.subr.bf16.mxu0 0
        %382 = vmatpush1.bf16.msra.mxu0 0
        %383 = vmatprep.subr.bf16.mxu0 0
        %384 = vmatpush1.bf16.msra.mxu0 0
        %385 = vmatprep.subr.bf16.mxu0 0
        %386 = vmatpush1.bf16.msra.mxu0 0
        %387 = vmatprep.subr.bf16.mxu0 0
        %388 = vmatpush1.bf16.msra.mxu0 0
        %389 = vmatprep.subr.bf16.mxu0 0
        %390 = vmatpush1.bf16.msra.mxu0 0
        %391 = vmatprep.subr.bf16.mxu0 0
        %392 = vmatpush1.bf16.msra.mxu0 0
        %393 = vmatprep.subr.bf16.mxu0 0
        %394 = vmatpush1.bf16.msra.mxu0 0
        %395 = vmatprep.mubr.bf16.mxu0 0
        %396 = vmatmul.mubr.bf16.gmra.mrb[0].mxu0 %v239
        %v397 = vpop.f32.mrb[0].mxu0
        %v398 = vadd.f32 %v276, %v397
        %v399 = vpop.f32.mrb[0].mxu0
        %v400 = vadd.f32 %v280, %v399
        %v401 = vpop.f32.mrb[0].mxu0
        %v402 = vadd.f32 %v276, %v401
        %v403 = vpop.f32.mrb[0].mxu0
        %v404 = vadd.f32 %v280, %v403
        %405 = vmatprep.mubr.bf16.mxu0 0
        %406 = vmatmul.mubr.bf16.gmra.mrb[0].mxu0 %v240
        %v407 = vpop.f32.mrb[0].mxu0
        %v408 = vadd.f32 %v276, %v407
        %v409 = vpop.f32.mrb[0].mxu0
        %v410 = vadd.f32 %v280, %v409
        %v411 = vpop.f32.mrb[0].mxu0
        %v412 = vadd.f32 %v276, %v411
        %v413 = vpop.f32.mrb[0].mxu0
        %v414 = vadd.f32 %v280, %v413
        %415 = vmatprep.mubr.bf16.mxu0 0
        %416 = vmatmul.mubr.bf16.gmra.mrb[0].mxu0 %v241
        %v417 = vpop.f32.mrb[0].mxu0
        %v418 = vadd.f32 %v276, %v417
        %v419 = vpop.f32.mrb[0].mxu0
        %v420 = vadd.f32 %v280, %v419
        %v421 = vpop.f32.mrb[0].mxu0
        %v422 = vadd.f32 %v276, %v421
        %v423 = vpop.f32.mrb[0].mxu0
        %v424 = vadd.f32 %v280, %v423
        %425 = vmatprep.mubr.bf16.mxu0 0
        %426 = vmatmul.mubr.bf16.gmra.mrb[0].mxu0 %v242
        %v427 = vpop.f32.mrb[0].mxu0
        %v428 = vadd.f32 %v276, %v427
        %v429 = vpop.f32.mrb[0].mxu0
        %v430 = vadd.f32 %v280, %v429
        %v431 = vpop.f32.mrb[0].mxu0
        %v432 = vadd.f32 %v276, %v431
        %v433 = vpop.f32.mrb[0].mxu0
        %v434 = vadd.f32 %v280, %v433
        %435 = vmatprep.mubr.bf16.mxu0 0
        %436 = vmatmul.mubr.bf16.gmra.mrb[0].mxu0 %v243
        %v437 = vpop.f32.mrb[0].mxu0
        %v438 = vadd.f32 %v276, %v437
        %v439 = vpop.f32.mrb[0].mxu0
        %v440 = vadd.f32 %v280, %v439
        %v441 = vpop.f32.mrb[0].mxu0
        %v442 = vadd.f32 %v276, %v441
        %v443 = vpop.f32.mrb[0].mxu0
        %v444 = vadd.f32 %v280, %v443
        %445 = vmatprep.mubr.bf16.mxu0 0
        %446 = vmatmul.mubr.bf16.gmra.mrb[0].mxu0 %v244
        %v447 = vpop.f32.mrb[0].mxu0
        %v448 = vadd.f32 %v276, %v447
        %v449 = vpop.f32.mrb[0].mxu0
        %v450 = vadd.f32 %v280, %v449
        %v451 = vpop.f32.mrb[0].mxu0
        %v452 = vadd.f32 %v276, %v451
        %v453 = vpop.f32.mrb[0].mxu0
        %v454 = vadd.f32 %v280, %v453
        %455 = vmatprep.mubr.bf16.mxu0 0
        %456 = vmatmul.mubr.bf16.gmra.mrb[0].mxu0 %v245
        %v457 = vpop.f32.mrb[0].mxu0
        %v458 = vadd.f32 %v276, %v457
        %v459 = vpop.f32.mrb[0].mxu0
        %v460 = vadd.f32 %v280, %v459
        %v461 = vpop.f32.mrb[0].mxu0
        %v462 = vadd.f32 %v276, %v461
        %v463 = vpop.f32.mrb[0].mxu0
        %v464 = vadd.f32 %v280, %v463
        %465 = vmatprep.mubr.bf16.mxu0 0
        %466 = vmatmul.mubr.bf16.gmra.mrb[0].mxu0 %v246
        %v467 = vpop.f32.mrb[0].mxu0
        %v468 = vadd.f32 %v276, %v467
        %v469 = vpop.f32.mrb[0].mxu0
        %v470 = vadd.f32 %v280, %v469
        %v471 = vpop.f32.mrb[0].mxu0
        %v472 = vadd.f32 %v276, %v471
        %v473 = vpop.f32.mrb[0].mxu0
        %v474 = vadd.f32 %v280, %v473
        %475 = vmatprep.mubr.bf16.mxu0 0
        %476 = vmatmul.mubr.bf16.gmra.mrb[0].mxu0 %v247
        %v477 = vpop.f32.mrb[0].mxu0
        %v478 = vadd.f32 %v276, %v477
        %v479 = vpop.f32.mrb[0].mxu0
        %v480 = vadd.f32 %v280, %v479
        %v481 = vpop.f32.mrb[0].mxu0
        %v482 = vadd.f32 %v276, %v481
        %v483 = vpop.f32.mrb[0].mxu0
        %v484 = vadd.f32 %v280, %v483
        %485 = vmatprep.mubr.bf16.mxu0 0
        %486 = vmatmul.mubr.bf16.gmra.mrb[0].mxu0 %v248
        %v487 = vpop.f32.mrb[0].mxu0
        %v488 = vadd.f32 %v276, %v487
        %v489 = vpop.f32.mrb[0].mxu0
        %v490 = vadd.f32 %v280, %v489
        %v491 = vpop.f32.mrb[0].mxu0
        %v492 = vadd.f32 %v276, %v491
        %v493 = vpop.f32.mrb[0].mxu0
        %v494 = vadd.f32 %v280, %v493
        %495 = vmatprep.mubr.bf16.mxu0 0
        %496 = vmatmul.mubr.bf16.gmra.mrb[0].mxu0 %v249
        %v497 = vpop.f32.mrb[0].mxu0
        %v498 = vadd.f32 %v276, %v497
        %v499 = vpop.f32.mrb[0].mxu0
        %v500 = vadd.f32 %v280, %v499
        %v501 = vpop.f32.mrb[0].mxu0
        %v502 = vadd.f32 %v276, %v501
        %v503 = vpop.f32.mrb[0].mxu0
        %v504 = vadd.f32 %v280, %v503
        %505 = vmatprep.mubr.bf16.mxu0 0
        %506 = vmatmul.mubr.bf16.gmra.mrb[0].mxu0 %v250
        %v507 = vpop.f32.mrb[0].mxu0
        %v508 = vadd.f32 %v276, %v507
        %v509 = vpop.f32.mrb[0].mxu0
        %v510 = vadd.f32 %v280, %v509
        %v511 = vpop.f32.mrb[0].mxu0
        %v512 = vadd.f32 %v276, %v511
        %v513 = vpop.f32.mrb[0].mxu0
        %v514 = vadd.f32 %v280, %v513
        %515 = vmatprep.mubr.bf16.mxu0 0
        %516 = vmatmul.mubr.bf16.gmra.mrb[0].mxu0 %v251
        %v517 = vpop.f32.mrb[0].mxu0
        %v518 = vadd.f32 %v276, %v517
        %v519 = vpop.f32.mrb[0].mxu0
        %v520 = vadd.f32 %v280, %v519
        %v521 = vpop.f32.mrb[0].mxu0
        %v522 = vadd.f32 %v276, %v521
        %v523 = vpop.f32.mrb[0].mxu0
        %v524 = vadd.f32 %v280, %v523
        %525 = vmatprep.mubr.bf16.mxu0 0
        %526 = vmatmul.mubr.bf16.gmra.mrb[0].mxu0 %v252
        %v527 = vpop.f32.mrb[0].mxu0
        %v528 = vadd.f32 %v276, %v527
        %v529 = vpop.f32.mrb[0].mxu0
        %v530 = vadd.f32 %v280, %v529
        %v531 = vpop.f32.mrb[0].mxu0
        %v532 = vadd.f32 %v276, %v531
        %v533 = vpop.f32.mrb[0].mxu0
        %v534 = vadd.f32 %v280, %v533
        %535 = vmatprep.mubr.bf16.mxu0 0
        %536 = vmatmul.mubr.bf16.gmra.mrb[0].mxu0 %v253
        %v537 = vpop.f32.mrb[0].mxu0
        %v538 = vadd.f32 %v276, %v537
        %v539 = vpop.f32.mrb[0].mxu0
        %v540 = vadd.f32 %v280, %v539
        %v541 = vpop.f32.mrb[0].mxu0
        %v542 = vadd.f32 %v276, %v541
        %v543 = vpop.f32.mrb[0].mxu0
        %v544 = vadd.f32 %v280, %v543
        %545 = vmatprep.mubr.bf16.mxu0 0
        %546 = vmatmul.mubr.bf16.gmra.mrb[0].mxu0 %v254
        %v547 = vpop.f32.mrb[0].mxu0
        %v548 = vadd.f32 %v276, %v547
        %v549 = vpop.f32.mrb[0].mxu0
        %v550 = vadd.f32 %v280, %v549
        %v551 = vpop.f32.mrb[0].mxu0
        %v552 = vadd.f32 %v276, %v551
        %v553 = vpop.f32.mrb[0].mxu0
        %v554 = vadd.f32 %v280, %v553
        %555 = vdwg.mxu0
        %v556 = vsub.f32 0.0, %v400
        %v557 = vsub.f32 0.0, %v404
        %v558 = vsub.f32 0.0, %v410
        %v559 = vsub.f32 0.0, %v414
        %v560 = vsub.f32 0.0, %v420
        %v561 = vsub.f32 0.0, %v424
        %v562 = vsub.f32 0.0, %v430
        %v563 = vsub.f32 0.0, %v434
        %v564 = vsub.f32 0.0, %v440
        %v565 = vsub.f32 0.0, %v444
        %v566 = vsub.f32 0.0, %v450
        %v567 = vsub.f32 0.0, %v454
        %v568 = vsub.f32 0.0, %v460
        %v569 = vsub.f32 0.0, %v464
        %v570 = vsub.f32 0.0, %v470
        %v571 = vsub.f32 0.0, %v474
        %v572 = vsub.f32 0.0, %v480
        %v573 = vsub.f32 0.0, %v484
        %v574 = vsub.f32 0.0, %v490
        %v575 = vsub.f32 0.0, %v494
        %v576 = vsub.f32 0.0, %v500
        %v577 = vsub.f32 0.0, %v504
        %v578 = vsub.f32 0.0, %v510
        %v579 = vsub.f32 0.0, %v514
        %v580 = vsub.f32 0.0, %v520
        %v581 = vsub.f32 0.0, %v524
        %v582 = vsub.f32 0.0, %v530
        %v583 = vsub.f32 0.0, %v534
        %v584 = vsub.f32 0.0, %v540
        %v585 = vsub.f32 0.0, %v544
        %v586 = vsub.f32 0.0, %v550
        %v587 = vsub.f32 0.0, %v554
        %v588 = vmul.f32 %v556, 1.442695
        %v589 = vpow.pop %v588
        %v590 = vmul.f32 %v557, 1.442695
        %v591 = vpow.pop %v590
        %v592 = vmul.f32 %v558, 1.442695
        %v593 = vpow.pop %v592
        %v594 = vmul.f32 %v559, 1.442695
        %v595 = vpow.pop %v594
        %v596 = vmul.f32 %v560, 1.442695
        %v597 = vpow.pop %v596
        %v598 = vmul.f32 %v561, 1.442695
        %v599 = vpow.pop %v598
        %v600 = vmul.f32 %v562, 1.442695
        %v601 = vpow.pop %v600
        %v602 = vmul.f32 %v563, 1.442695
        %v603 = vpow.pop %v602
        %v604 = vmul.f32 %v564, 1.442695
        %v605 = vpow.pop %v604
        %v606 = vmul.f32 %v565, 1.442695
        %v607 = vpow.pop %v606
        %v608 = vmul.f32 %v566, 1.442695
        %v609 = vpow.pop %v608
        %v610 = vmul.f32 %v567, 1.442695
        %v611 = vpow.pop %v610
        %v612 = vmul.f32 %v568, 1.442695
        %v613 = vpow.pop %v612
        %v614 = vmul.f32 %v569, 1.442695
        %v615 = vpow.pop %v614
        %v616 = vmul.f32 %v570, 1.442695
        %v617 = vpow.pop %v616
        %v618 = vmul.f32 %v571, 1.442695
        %v619 = vpow.pop %v618
        %v620 = vmul.f32 %v572, 1.442695
        %v621 = vpow.pop %v620
        %v622 = vmul.f32 %v573, 1.442695
        %v623 = vpow.pop %v622
        %v624 = vmul.f32 %v574, 1.442695
        %v625 = vpow.pop %v624
        %v626 = vmul.f32 %v575, 1.442695
        %v627 = vpow.pop %v626
        %v628 = vmul.f32 %v576, 1.442695
        %v629 = vpow.pop %v628
        %v630 = vmul.f32 %v577, 1.442695
        %v631 = vpow.pop %v630
        %v632 = vmul.f32 %v578, 1.442695
        %v633 = vpow.pop %v632
        %v634 = vmul.f32 %v579, 1.442695
        %v635 = vpow.pop %v634
        %v636 = vmul.f32 %v580, 1.442695
        %v637 = vpow.pop %v636
        %v638 = vmul.f32 %v581, 1.442695
        %v639 = vpow.pop %v638
        %v640 = vmul.f32 %v582, 1.442695
        %v641 = vpow.pop %v640
        %v642 = vmul.f32 %v583, 1.442695
        %v643 = vpow.pop %v642
        %v644 = vmul.f32 %v584, 1.442695
        %v645 = vpow.pop %v644
        %v646 = vmul.f32 %v585, 1.442695
        %v647 = vpow.pop %v646
        %v648 = vmul.f32 %v586, 1.442695
        %v649 = vpow.pop %v648
        %v650 = vmul.f32 %v587, 1.442695
        %v651 = vpow.pop %v650
        %v652 = vadd.f32 %v589, 1.0
        %v653 = vadd.f32 %v591, 1.0
        %v654 = vadd.f32 %v593, 1.0
        %v655 = vadd.f32 %v595, 1.0
        %v656 = vadd.f32 %v597, 1.0
        %v657 = vadd.f32 %v599, 1.0
        %v658 = vadd.f32 %v601, 1.0
        %v659 = vadd.f32 %v603, 1.0
        %v660 = vadd.f32 %v605, 1.0
        %v661 = vadd.f32 %v607, 1.0
        %v662 = vadd.f32 %v609, 1.0
        %v663 = vadd.f32 %v611, 1.0
        %v664 = vadd.f32 %v613, 1.0
        %v665 = vadd.f32 %v615, 1.0
        %v666 = vadd.f32 %v617, 1.0
        %v667 = vadd.f32 %v619, 1.0
        %v668 = vadd.f32 %v621, 1.0
        %v669 = vadd.f32 %v623, 1.0
        %v670 = vadd.f32 %v625, 1.0
        %v671 = vadd.f32 %v627, 1.0
        %v672 = vadd.f32 %v629, 1.0
        %v673 = vadd.f32 %v631, 1.0
        %v674 = vadd.f32 %v633, 1.0
        %v675 = vadd.f32 %v635, 1.0
        %v676 = vadd.f32 %v637, 1.0
        %v677 = vadd.f32 %v639, 1.0
        %v678 = vadd.f32 %v641, 1.0
        %v679 = vadd.f32 %v643, 1.0
        %v680 = vadd.f32 %v645, 1.0
        %v681 = vadd.f32 %v647, 1.0
        %v682 = vadd.f32 %v649, 1.0
        %v683 = vadd.f32 %v651, 1.0
        %v684 = vrcp.pop %v652
        %v685 = vmul.f32 1.0, %v684
        %v686 = vrcp.pop %v653
        %v687 = vmul.f32 1.0, %v686
        %v688 = vrcp.pop %v654
        %v689 = vmul.f32 1.0, %v688
        %v690 = vrcp.pop %v655
        %v691 = vmul.f32 1.0, %v690
        %v692 = vrcp.pop %v656
        %v693 = vmul.f32 1.0, %v692
        %v694 = vrcp.pop %v657
        %v695 = vmul.f32 1.0, %v694
        %v696 = vrcp.pop %v658
        %v697 = vmul.f32 1.0, %v696
        %v698 = vrcp.pop %v659
        %v699 = vmul.f32 1.0, %v698
        %v700 = vrcp.pop %v660
        %v701 = vmul.f32 1.0, %v700
        %v702 = vrcp.pop %v661
        %v703 = vmul.f32 1.0, %v702
        %v704 = vrcp.pop %v662
        %v705 = vmul.f32 1.0, %v704
        %v706 = vrcp.pop %v663
        %v707 = vmul.f32 1.0, %v706
        %v708 = vrcp.pop %v664
        %v709 = vmul.f32 1.0, %v708
        %v710 = vrcp.pop %v665
        %v711 = vmul.f32 1.0, %v710
        %v712 = vrcp.pop %v666
        %v713 = vmul.f32 1.0, %v712
        %v714 = vrcp.pop %v667
        %v715 = vmul.f32 1.0, %v714
        %v716 = vrcp.pop %v668
        %v717 = vmul.f32 1.0, %v716
        %v718 = vrcp.pop %v669
        %v719 = vmul.f32 1.0, %v718
        %v720 = vrcp.pop %v670
        %v721 = vmul.f32 1.0, %v720
        %v722 = vrcp.pop %v671
        %v723 = vmul.f32 1.0, %v722
        %v724 = vrcp.pop %v672
        %v725 = vmul.f32 1.0, %v724
        %v726 = vrcp.pop %v673
        %v727 = vmul.f32 1.0, %v726
        %v728 = vrcp.pop %v674
        %v729 = vmul.f32 1.0, %v728
        %v730 = vrcp.pop %v675
        %v731 = vmul.f32 1.0, %v730
        %v732 = vrcp.pop %v676
        %v733 = vmul.f32 1.0, %v732
        %v734 = vrcp.pop %v677
        %v735 = vmul.f32 1.0, %v734
        %v736 = vrcp.pop %v678
        %v737 = vmul.f32 1.0, %v736
        %v738 = vrcp.pop %v679
        %v739 = vmul.f32 1.0, %v738
        %v740 = vrcp.pop %v680
        %v741 = vmul.f32 1.0, %v740
        %v742 = vrcp.pop %v681
        %v743 = vmul.f32 1.0, %v742
        %v744 = vrcp.pop %v682
        %v745 = vmul.f32 1.0, %v744
        %v746 = vrcp.pop %v683
        %v747 = vmul.f32 1.0, %v746
        %v748 = vmul.f32 %v398, %v685
        %v749 = vmul.f32 %v402, %v687
        %v750 = vmul.f32 %v408, %v689
        %v751 = vmul.f32 %v412, %v691
        %v752 = vmul.f32 %v418, %v693
        %v753 = vmul.f32 %v422, %v695
        %v754 = vmul.f32 %v428, %v697
        %v755 = vmul.f32 %v432, %v699
        %v756 = vmul.f32 %v438, %v701
        %v757 = vmul.f32 %v442, %v703
        %v758 = vmul.f32 %v448, %v705
        %v759 = vmul.f32 %v452, %v707
        %v760 = vmul.f32 %v458, %v709
        %v761 = vmul.f32 %v462, %v711
        %v762 = vmul.f32 %v468, %v713
        %v763 = vmul.f32 %v472, %v715
        %v764 = vmul.f32 %v478, %v717
        %v765 = vmul.f32 %v482, %v719
        %v766 = vmul.f32 %v488, %v721
        %v767 = vmul.f32 %v492, %v723
        %v768 = vmul.f32 %v498, %v725
        %v769 = vmul.f32 %v502, %v727
        %v770 = vmul.f32 %v508, %v729
        %v771 = vmul.f32 %v512, %v731
        %v772 = vmul.f32 %v518, %v733
        %v773 = vmul.f32 %v522, %v735
        %v774 = vmul.f32 %v528, %v737
        %v775 = vmul.f32 %v532, %v739
        %v776 = vmul.f32 %v538, %v741
        %v777 = vmul.f32 %v542, %v743
        %v778 = vmul.f32 %v548, %v745
        %v779 = vmul.f32 %v552, %v747
        %v780 = vpack.c.bf16 %v749, %v748
        %v781 = vpack.c.bf16 %v751, %v750
        %v782 = vpack.c.bf16 %v753, %v752
        %v783 = vpack.c.bf16 %v755, %v754
        %v784 = vpack.c.bf16 %v757, %v756
        %v785 = vpack.c.bf16 %v759, %v758
        %v786 = vpack.c.bf16 %v761, %v760
        %v787 = vpack.c.bf16 %v763, %v762
        %v788 = vpack.c.bf16 %v765, %v764
        %v789 = vpack.c.bf16 %v767, %v766
        %v790 = vpack.c.bf16 %v769, %v768
        %v791 = vpack.c.bf16 %v771, %v770
        %v792 = vpack.c.bf16 %v773, %v772
        %v793 = vpack.c.bf16 %v775, %v774
        %v794 = vpack.c.bf16 %v777, %v776
        %v795 = vpack.c.bf16 %v779, %v778
        %s796 = scalar_lea.vmem [#allocation5], 128
        %v797 = vld [vmem:[%s796] sm:$0xff]
        %v798 = vld [vmem:[%s796 + $0x8] sm:$0xff]
        %v799 = vld [vmem:[%s796 + $0x10] sm:$0xff]
        %v800 = vld [vmem:[%s796 + $0x18] sm:$0xff]
        %v801 = vld [vmem:[%s796 + $0x20] sm:$0xff]
        %v802 = vld [vmem:[%s796 + $0x28] sm:$0xff]
        %v803 = vld [vmem:[%s796 + $0x30] sm:$0xff]
        %v804 = vld [vmem:[%s796 + $0x38] sm:$0xff]
        %v805 = vld [vmem:[%s796 + $0x40] sm:$0xff]
        %v806 = vld [vmem:[%s796 + $0x48] sm:$0xff]
        %v807 = vld [vmem:[%s796 + $0x50] sm:$0xff]
        %v808 = vld [vmem:[%s796 + $0x58] sm:$0xff]
        %v809 = vld [vmem:[%s796 + $0x60] sm:$0xff]
        %v810 = vld [vmem:[%s796 + $0x68] sm:$0xff]
        %v811 = vld [vmem:[%s796 + $0x70] sm:$0xff]
        %v812 = vld [vmem:[%s796 + $0x78] sm:$0xff]
        %s813 = scalar_lea.vmem %s2, 2
        %v814 = vld [vmem:[%s813] sm:$0x3]
        %v816 = vlaneseq
        %v817 = vshrl.u32 %v816, 7
        %v818 = vsub.s32 0, %v817
        %v819 = vrot.slane %v814, %v818
        %v820 = vlaneseq
        %v821 = vshrl.u32 %v820, 7
        %v822 = vsub.s32 1, %v821
        %v823 = vrot.slane %v814, %v822
        %v842 = vunpack.c.l.b16 %v797
        %v843 = vunpack.c.h.b16 %v797
        %v844 = vunpack.c.l.b16 %v798
        %v845 = vunpack.c.h.b16 %v798
        %v846 = vunpack.c.l.b16 %v799
        %v847 = vunpack.c.h.b16 %v799
        %v848 = vunpack.c.l.b16 %v800
        %v849 = vunpack.c.h.b16 %v800
        %v850 = vunpack.c.l.b16 %v801
        %v851 = vunpack.c.h.b16 %v801
        %v852 = vunpack.c.l.b16 %v802
        %v853 = vunpack.c.h.b16 %v802
        %v854 = vunpack.c.l.b16 %v803
        %v855 = vunpack.c.h.b16 %v803
        %v856 = vunpack.c.l.b16 %v804
        %v857 = vunpack.c.h.b16 %v804
        %v858 = vunpack.c.l.b16 %v805
        %v859 = vunpack.c.h.b16 %v805
        %v860 = vunpack.c.l.b16 %v806
        %v861 = vunpack.c.h.b16 %v806
        %v862 = vunpack.c.l.b16 %v807
        %v863 = vunpack.c.h.b16 %v807
        %v864 = vunpack.c.l.b16 %v808
        %v865 = vunpack.c.h.b16 %v808
        %v866 = vunpack.c.l.b16 %v809
        %v867 = vunpack.c.h.b16 %v809
        %v868 = vunpack.c.l.b16 %v810
        %v869 = vunpack.c.h.b16 %v810
        %v870 = vunpack.c.l.b16 %v811
        %v871 = vunpack.c.h.b16 %v811
        %v872 = vunpack.c.l.b16 %v812
        %v873 = vunpack.c.h.b16 %v812
        %v874 = vpack.c.b16 %v844, %v842
        %v875 = vpack.c.b16 %v845, %v843
        %v876 = vpack.c.b16 %v848, %v846
        %v877 = vpack.c.b16 %v849, %v847
        %v878 = vpack.c.b16 %v852, %v850
        %v879 = vpack.c.b16 %v853, %v851
        %v880 = vpack.c.b16 %v856, %v854
        %v881 = vpack.c.b16 %v857, %v855
        %v882 = vpack.c.b16 %v860, %v858
        %v883 = vpack.c.b16 %v861, %v859
        %v884 = vpack.c.b16 %v864, %v862
        %v885 = vpack.c.b16 %v865, %v863
        %v886 = vpack.c.b16 %v868, %v866
        %v887 = vpack.c.b16 %v869, %v867
        %v888 = vpack.c.b16 %v872, %v870
        %v889 = vpack.c.b16 %v873, %v871
        %906 = vmatprep.subr.bf16.mxu0 %v875
        %907 = vmatpush1.bf16.msra.mxu0 %v874
        %908 = vmatprep.subr.bf16.mxu0 %v877
        %909 = vmatpush1.bf16.msra.mxu0 %v876
        %910 = vmatprep.subr.bf16.mxu0 %v879
        %911 = vmatpush1.bf16.msra.mxu0 %v878
        %912 = vmatprep.subr.bf16.mxu0 %v881
        %913 = vmatpush1.bf16.msra.mxu0 %v880
        %914 = vmatprep.subr.bf16.mxu0 %v883
        %915 = vmatpush1.bf16.msra.mxu0 %v882
        %916 = vmatprep.subr.bf16.mxu0 %v885
        %917 = vmatpush1.bf16.msra.mxu0 %v884
        %918 = vmatprep.subr.bf16.mxu0 %v887
        %919 = vmatpush1.bf16.msra.mxu0 %v886
        %920 = vmatprep.subr.bf16.mxu0 %v889
        %921 = vmatpush1.bf16.msra.mxu0 %v888
        %922 = vmatprep.subr.bf16.mxu0 0
        %923 = vmatpush1.bf16.msra.mxu0 0
        %924 = vmatprep.subr.bf16.mxu0 0
        %925 = vmatpush1.bf16.msra.mxu0 0
        %926 = vmatprep.subr.bf16.mxu0 0
        %927 = vmatpush1.bf16.msra.mxu0 0
        %928 = vmatprep.subr.bf16.mxu0 0
        %929 = vmatpush1.bf16.msra.mxu0 0
        %930 = vmatprep.subr.bf16.mxu0 0
        %931 = vmatpush1.bf16.msra.mxu0 0
        %932 = vmatprep.subr.bf16.mxu0 0
        %933 = vmatpush1.bf16.msra.mxu0 0
        %934 = vmatprep.subr.bf16.mxu0 0
        %935 = vmatpush1.bf16.msra.mxu0 0
        %936 = vmatprep.subr.bf16.mxu0 0
        %937 = vmatpush1.bf16.msra.mxu0 0
        %938 = vmatprep.mubr.bf16.mxu0 0
        %939 = vmatmul.mubr.bf16.gmra.mrb[0].mxu0 %v780
        %v940 = vpop.f32.mrb[0].mxu0
        %v941 = vadd.f32 %v819, %v940
        %v942 = vpop.f32.mrb[0].mxu0
        %v943 = vadd.f32 %v823, %v942
        %v944 = vpop.f32.mrb[0].mxu0
        %v945 = vadd.f32 %v819, %v944
        %v946 = vpop.f32.mrb[0].mxu0
        %v947 = vadd.f32 %v823, %v946
        %948 = vmatprep.mubr.bf16.mxu0 0
        %949 = vmatmul.mubr.bf16.gmra.mrb[0].mxu0 %v781
        %v950 = vpop.f32.mrb[0].mxu0
        %v951 = vadd.f32 %v819, %v950
        %v952 = vpop.f32.mrb[0].mxu0
        %v953 = vadd.f32 %v823, %v952
        %v954 = vpop.f32.mrb[0].mxu0
        %v955 = vadd.f32 %v819, %v954
        %v956 = vpop.f32.mrb[0].mxu0
        %v957 = vadd.f32 %v823, %v956
        %958 = vmatprep.mubr.bf16.mxu0 0
        %959 = vmatmul.mubr.bf16.gmra.mrb[0].mxu0 %v782
        %v960 = vpop.f32.mrb[0].mxu0
        %v961 = vadd.f32 %v819, %v960
        %v962 = vpop.f32.mrb[0].mxu0
        %v963 = vadd.f32 %v823, %v962
        %v964 = vpop.f32.mrb[0].mxu0
        %v965 = vadd.f32 %v819, %v964
        %v966 = vpop.f32.mrb[0].mxu0
        %v967 = vadd.f32 %v823, %v966
        %968 = vmatprep.mubr.bf16.mxu0 0
        %969 = vmatmul.mubr.bf16.gmra.mrb[0].mxu0 %v783
        %v970 = vpop.f32.mrb[0].mxu0
        %v971 = vadd.f32 %v819, %v970
        %v972 = vpop.f32.mrb[0].mxu0
        %v973 = vadd.f32 %v823, %v972
        %v974 = vpop.f32.mrb[0].mxu0
        %v975 = vadd.f32 %v819, %v974
        %v976 = vpop.f32.mrb[0].mxu0
        %v977 = vadd.f32 %v823, %v976
        %978 = vmatprep.mubr.bf16.mxu0 0
        %979 = vmatmul.mubr.bf16.gmra.mrb[0].mxu0 %v784
        %v980 = vpop.f32.mrb[0].mxu0
        %v981 = vadd.f32 %v819, %v980
        %v982 = vpop.f32.mrb[0].mxu0
        %v983 = vadd.f32 %v823, %v982
        %v984 = vpop.f32.mrb[0].mxu0
        %v985 = vadd.f32 %v819, %v984
        %v986 = vpop.f32.mrb[0].mxu0
        %v987 = vadd.f32 %v823, %v986
        %988 = vmatprep.mubr.bf16.mxu0 0
        %989 = vmatmul.mubr.bf16.gmra.mrb[0].mxu0 %v785
        %v990 = vpop.f32.mrb[0].mxu0
        %v991 = vadd.f32 %v819, %v990
        %v992 = vpop.f32.mrb[0].mxu0
        %v993 = vadd.f32 %v823, %v992
        %v994 = vpop.f32.mrb[0].mxu0
        %v995 = vadd.f32 %v819, %v994
        %v996 = vpop.f32.mrb[0].mxu0
        %v997 = vadd.f32 %v823, %v996
        %998 = vmatprep.mubr.bf16.mxu0 0
        %999 = vmatmul.mubr.bf16.gmra.mrb[0].mxu0 %v786
        %v1000 = vpop.f32.mrb[0].mxu0
        %v1001 = vadd.f32 %v819, %v1000
        %v1002 = vpop.f32.mrb[0].mxu0
        %v1003 = vadd.f32 %v823, %v1002
        %v1004 = vpop.f32.mrb[0].mxu0
        %v1005 = vadd.f32 %v819, %v1004
        %v1006 = vpop.f32.mrb[0].mxu0
        %v1007 = vadd.f32 %v823, %v1006
        %1008 = vmatprep.mubr.bf16.mxu0 0
        %1009 = vmatmul.mubr.bf16.gmra.mrb[0].mxu0 %v787
        %v1010 = vpop.f32.mrb[0].mxu0
        %v1011 = vadd.f32 %v819, %v1010
        %v1012 = vpop.f32.mrb[0].mxu0
        %v1013 = vadd.f32 %v823, %v1012
        %v1014 = vpop.f32.mrb[0].mxu0
        %v1015 = vadd.f32 %v819, %v1014
        %v1016 = vpop.f32.mrb[0].mxu0
        %v1017 = vadd.f32 %v823, %v1016
        %1018 = vmatprep.mubr.bf16.mxu0 0
        %1019 = vmatmul.mubr.bf16.gmra.mrb[0].mxu0 %v788
        %v1020 = vpop.f32.mrb[0].mxu0
        %v1021 = vadd.f32 %v819, %v1020
        %v1022 = vpop.f32.mrb[0].mxu0
        %v1023 = vadd.f32 %v823, %v1022
        %v1024 = vpop.f32.mrb[0].mxu0
        %v1025 = vadd.f32 %v819, %v1024
        %v1026 = vpop.f32.mrb[0].mxu0
        %v1027 = vadd.f32 %v823, %v1026
        %1028 = vmatprep.mubr.bf16.mxu0 0
        %1029 = vmatmul.mubr.bf16.gmra.mrb[0].mxu0 %v789
        %v1030 = vpop.f32.mrb[0].mxu0
        %v1031 = vadd.f32 %v819, %v1030
        %v1032 = vpop.f32.mrb[0].mxu0
        %v1033 = vadd.f32 %v823, %v1032
        %v1034 = vpop.f32.mrb[0].mxu0
        %v1035 = vadd.f32 %v819, %v1034
        %v1036 = vpop.f32.mrb[0].mxu0
        %v1037 = vadd.f32 %v823, %v1036
        %1038 = vmatprep.mubr.bf16.mxu0 0
        %1039 = vmatmul.mubr.bf16.gmra.mrb[0].mxu0 %v790
        %v1040 = vpop.f32.mrb[0].mxu0
        %v1041 = vadd.f32 %v819, %v1040
        %v1042 = vpop.f32.mrb[0].mxu0
        %v1043 = vadd.f32 %v823, %v1042
        %v1044 = vpop.f32.mrb[0].mxu0
        %v1045 = vadd.f32 %v819, %v1044
        %v1046 = vpop.f32.mrb[0].mxu0
        %v1047 = vadd.f32 %v823, %v1046
        %1048 = vmatprep.mubr.bf16.mxu0 0
        %1049 = vmatmul.mubr.bf16.gmra.mrb[0].mxu0 %v791
        %v1050 = vpop.f32.mrb[0].mxu0
        %v1051 = vadd.f32 %v819, %v1050
        %v1052 = vpop.f32.mrb[0].mxu0
        %v1053 = vadd.f32 %v823, %v1052
        %v1054 = vpop.f32.mrb[0].mxu0
        %v1055 = vadd.f32 %v819, %v1054
        %v1056 = vpop.f32.mrb[0].mxu0
        %v1057 = vadd.f32 %v823, %v1056
        %1058 = vmatprep.mubr.bf16.mxu0 0
        %1059 = vmatmul.mubr.bf16.gmra.mrb[0].mxu0 %v792
        %v1060 = vpop.f32.mrb[0].mxu0
        %v1061 = vadd.f32 %v819, %v1060
        %v1062 = vpop.f32.mrb[0].mxu0
        %v1063 = vadd.f32 %v823, %v1062
        %v1064 = vpop.f32.mrb[0].mxu0
        %v1065 = vadd.f32 %v819, %v1064
        %v1066 = vpop.f32.mrb[0].mxu0
        %v1067 = vadd.f32 %v823, %v1066
        %1068 = vmatprep.mubr.bf16.mxu0 0
        %1069 = vmatmul.mubr.bf16.gmra.mrb[0].mxu0 %v793
        %v1070 = vpop.f32.mrb[0].mxu0
        %v1071 = vadd.f32 %v819, %v1070
        %v1072 = vpop.f32.mrb[0].mxu0
        %v1073 = vadd.f32 %v823, %v1072
        %v1074 = vpop.f32.mrb[0].mxu0
        %v1075 = vadd.f32 %v819, %v1074
        %v1076 = vpop.f32.mrb[0].mxu0
        %v1077 = vadd.f32 %v823, %v1076
        %1078 = vmatprep.mubr.bf16.mxu0 0
        %1079 = vmatmul.mubr.bf16.gmra.mrb[0].mxu0 %v794
        %v1080 = vpop.f32.mrb[0].mxu0
        %v1081 = vadd.f32 %v819, %v1080
        %v1082 = vpop.f32.mrb[0].mxu0
        %v1083 = vadd.f32 %v823, %v1082
        %v1084 = vpop.f32.mrb[0].mxu0
        %v1085 = vadd.f32 %v819, %v1084
        %v1086 = vpop.f32.mrb[0].mxu0
        %v1087 = vadd.f32 %v823, %v1086
        %1088 = vmatprep.mubr.bf16.mxu0 0
        %1089 = vmatmul.mubr.bf16.gmra.mrb[0].mxu0 %v795
        %v1090 = vpop.f32.mrb[0].mxu0
        %v1091 = vadd.f32 %v819, %v1090
        %v1092 = vpop.f32.mrb[0].mxu0
        %v1093 = vadd.f32 %v823, %v1092
        %v1094 = vpop.f32.mrb[0].mxu0
        %v1095 = vadd.f32 %v819, %v1094
        %v1096 = vpop.f32.mrb[0].mxu0
        %v1097 = vadd.f32 %v823, %v1096
        %1098 = vdwg.mxu0
        %v1099 = vsub.f32 0.0, %v943
        %v1100 = vsub.f32 0.0, %v947
        %v1101 = vsub.f32 0.0, %v953
        %v1102 = vsub.f32 0.0, %v957
        %v1103 = vsub.f32 0.0, %v963
        %v1104 = vsub.f32 0.0, %v967
        %v1105 = vsub.f32 0.0, %v973
        %v1106 = vsub.f32 0.0, %v977
        %v1107 = vsub.f32 0.0, %v983
        %v1108 = vsub.f32 0.0, %v987
        %v1109 = vsub.f32 0.0, %v993
        %v1110 = vsub.f32 0.0, %v997
        %v1111 = vsub.f32 0.0, %v1003
        %v1112 = vsub.f32 0.0, %v1007
        %v1113 = vsub.f32 0.0, %v1013
        %v1114 = vsub.f32 0.0, %v1017
        %v1115 = vsub.f32 0.0, %v1023
        %v1116 = vsub.f32 0.0, %v1027
        %v1117 = vsub.f32 0.0, %v1033
        %v1118 = vsub.f32 0.0, %v1037
        %v1119 = vsub.f32 0.0, %v1043
        %v1120 = vsub.f32 0.0, %v1047
        %v1121 = vsub.f32 0.0, %v1053
        %v1122 = vsub.f32 0.0, %v1057
        %v1123 = vsub.f32 0.0, %v1063
        %v1124 = vsub.f32 0.0, %v1067
        %v1125 = vsub.f32 0.0, %v1073
        %v1126 = vsub.f32 0.0, %v1077
        %v1127 = vsub.f32 0.0, %v1083
        %v1128 = vsub.f32 0.0, %v1087
        %v1129 = vsub.f32 0.0, %v1093
        %v1130 = vsub.f32 0.0, %v1097
        %v1131 = vmul.f32 %v1099, 1.442695
        %v1132 = vpow.pop %v1131
        %v1133 = vmul.f32 %v1100, 1.442695
        %v1134 = vpow.pop %v1133
        %v1135 = vmul.f32 %v1101, 1.442695
        %v1136 = vpow.pop %v1135
        %v1137 = vmul.f32 %v1102, 1.442695
        %v1138 = vpow.pop %v1137
        %v1139 = vmul.f32 %v1103, 1.442695
        %v1140 = vpow.pop %v1139
        %v1141 = vmul.f32 %v1104, 1.442695
        %v1142 = vpow.pop %v1141
        %v1143 = vmul.f32 %v1105, 1.442695
        %v1144 = vpow.pop %v1143
        %v1145 = vmul.f32 %v1106, 1.442695
        %v1146 = vpow.pop %v1145
        %v1147 = vmul.f32 %v1107, 1.442695
        %v1148 = vpow.pop %v1147
        %v1149 = vmul.f32 %v1108, 1.442695
        %v1150 = vpow.pop %v1149
        %v1151 = vmul.f32 %v1109, 1.442695
        %v1152 = vpow.pop %v1151
        %v1153 = vmul.f32 %v1110, 1.442695
        %v1154 = vpow.pop %v1153
        %v1155 = vmul.f32 %v1111, 1.442695
        %v1156 = vpow.pop %v1155
        %v1157 = vmul.f32 %v1112, 1.442695
        %v1158 = vpow.pop %v1157
        %v1159 = vmul.f32 %v1113, 1.442695
        %v1160 = vpow.pop %v1159
        %v1161 = vmul.f32 %v1114, 1.442695
        %v1162 = vpow.pop %v1161
        %v1163 = vmul.f32 %v1115, 1.442695
        %v1164 = vpow.pop %v1163
        %v1165 = vmul.f32 %v1116, 1.442695
        %v1166 = vpow.pop %v1165
        %v1167 = vmul.f32 %v1117, 1.442695
        %v1168 = vpow.pop %v1167
        %v1169 = vmul.f32 %v1118, 1.442695
        %v1170 = vpow.pop %v1169
        %v1171 = vmul.f32 %v1119, 1.442695
        %v1172 = vpow.pop %v1171
        %v1173 = vmul.f32 %v1120, 1.442695
        %v1174 = vpow.pop %v1173
        %v1175 = vmul.f32 %v1121, 1.442695
        %v1176 = vpow.pop %v1175
        %v1177 = vmul.f32 %v1122, 1.442695
        %v1178 = vpow.pop %v1177
        %v1179 = vmul.f32 %v1123, 1.442695
        %v1180 = vpow.pop %v1179
        %v1181 = vmul.f32 %v1124, 1.442695
        %v1182 = vpow.pop %v1181
        %v1183 = vmul.f32 %v1125, 1.442695
        %v1184 = vpow.pop %v1183
        %v1185 = vmul.f32 %v1126, 1.442695
        %v1186 = vpow.pop %v1185
        %v1187 = vmul.f32 %v1127, 1.442695
        %v1188 = vpow.pop %v1187
        %v1189 = vmul.f32 %v1128, 1.442695
        %v1190 = vpow.pop %v1189
        %v1191 = vmul.f32 %v1129, 1.442695
        %v1192 = vpow.pop %v1191
        %v1193 = vmul.f32 %v1130, 1.442695
        %v1194 = vpow.pop %v1193
        %v1195 = vadd.f32 %v1132, 1.0
        %v1196 = vadd.f32 %v1134, 1.0
        %v1197 = vadd.f32 %v1136, 1.0
        %v1198 = vadd.f32 %v1138, 1.0
        %v1199 = vadd.f32 %v1140, 1.0
        %v1200 = vadd.f32 %v1142, 1.0
        %v1201 = vadd.f32 %v1144, 1.0
        %v1202 = vadd.f32 %v1146, 1.0
        %v1203 = vadd.f32 %v1148, 1.0
        %v1204 = vadd.f32 %v1150, 1.0
        %v1205 = vadd.f32 %v1152, 1.0
        %v1206 = vadd.f32 %v1154, 1.0
        %v1207 = vadd.f32 %v1156, 1.0
        %v1208 = vadd.f32 %v1158, 1.0
        %v1209 = vadd.f32 %v1160, 1.0
        %v1210 = vadd.f32 %v1162, 1.0
        %v1211 = vadd.f32 %v1164, 1.0
        %v1212 = vadd.f32 %v1166, 1.0
        %v1213 = vadd.f32 %v1168, 1.0
        %v1214 = vadd.f32 %v1170, 1.0
        %v1215 = vadd.f32 %v1172, 1.0
        %v1216 = vadd.f32 %v1174, 1.0
        %v1217 = vadd.f32 %v1176, 1.0
        %v1218 = vadd.f32 %v1178, 1.0
        %v1219 = vadd.f32 %v1180, 1.0
        %v1220 = vadd.f32 %v1182, 1.0
        %v1221 = vadd.f32 %v1184, 1.0
        %v1222 = vadd.f32 %v1186, 1.0
        %v1223 = vadd.f32 %v1188, 1.0
        %v1224 = vadd.f32 %v1190, 1.0
        %v1225 = vadd.f32 %v1192, 1.0
        %v1226 = vadd.f32 %v1194, 1.0
        %v1227 = vrcp.pop %v1195
        %v1228 = vmul.f32 1.0, %v1227
        %v1229 = vrcp.pop %v1196
        %v1230 = vmul.f32 1.0, %v1229
        %v1231 = vrcp.pop %v1197
        %v1232 = vmul.f32 1.0, %v1231
        %v1233 = vrcp.pop %v1198
        %v1234 = vmul.f32 1.0, %v1233
        %v1235 = vrcp.pop %v1199
        %v1236 = vmul.f32 1.0, %v1235
        %v1237 = vrcp.pop %v1200
        %v1238 = vmul.f32 1.0, %v1237
        %v1239 = vrcp.pop %v1201
        %v1240 = vmul.f32 1.0, %v1239
        %v1241 = vrcp.pop %v1202
        %v1242 = vmul.f32 1.0, %v1241
        %v1243 = vrcp.pop %v1203
        %v1244 = vmul.f32 1.0, %v1243
        %v1245 = vrcp.pop %v1204
        %v1246 = vmul.f32 1.0, %v1245
        %v1247 = vrcp.pop %v1205
        %v1248 = vmul.f32 1.0, %v1247
        %v1249 = vrcp.pop %v1206
        %v1250 = vmul.f32 1.0, %v1249
        %v1251 = vrcp.pop %v1207
        %v1252 = vmul.f32 1.0, %v1251
        %v1253 = vrcp.pop %v1208
        %v1254 = vmul.f32 1.0, %v1253
        %v1255 = vrcp.pop %v1209
        %v1256 = vmul.f32 1.0, %v1255
        %v1257 = vrcp.pop %v1210
        %v1258 = vmul.f32 1.0, %v1257
        %v1259 = vrcp.pop %v1211
        %v1260 = vmul.f32 1.0, %v1259
        %v1261 = vrcp.pop %v1212
        %v1262 = vmul.f32 1.0, %v1261
        %v1263 = vrcp.pop %v1213
        %v1264 = vmul.f32 1.0, %v1263
        %v1265 = vrcp.pop %v1214
        %v1266 = vmul.f32 1.0, %v1265
        %v1267 = vrcp.pop %v1215
        %v1268 = vmul.f32 1.0, %v1267
        %v1269 = vrcp.pop %v1216
        %v1270 = vmul.f32 1.0, %v1269
        %v1271 = vrcp.pop %v1217
        %v1272 = vmul.f32 1.0, %v1271
        %v1273 = vrcp.pop %v1218
        %v1274 = vmul.f32 1.0, %v1273
        %v1275 = vrcp.pop %v1219
        %v1276 = vmul.f32 1.0, %v1275
        %v1277 = vrcp.pop %v1220
        %v1278 = vmul.f32 1.0, %v1277
        %v1279 = vrcp.pop %v1221
        %v1280 = vmul.f32 1.0, %v1279
        %v1281 = vrcp.pop %v1222
        %v1282 = vmul.f32 1.0, %v1281
        %v1283 = vrcp.pop %v1223
        %v1284 = vmul.f32 1.0, %v1283
        %v1285 = vrcp.pop %v1224
        %v1286 = vmul.f32 1.0, %v1285
        %v1287 = vrcp.pop %v1225
        %v1288 = vmul.f32 1.0, %v1287
        %v1289 = vrcp.pop %v1226
        %v1290 = vmul.f32 1.0, %v1289
        %v1291 = vmul.f32 %v941, %v1228
        %v1292 = vmul.f32 %v945, %v1230
        %v1293 = vmul.f32 %v951, %v1232
        %v1294 = vmul.f32 %v955, %v1234
        %v1295 = vmul.f32 %v961, %v1236
        %v1296 = vmul.f32 %v965, %v1238
        %v1297 = vmul.f32 %v971, %v1240
        %v1298 = vmul.f32 %v975, %v1242
        %v1299 = vmul.f32 %v981, %v1244
        %v1300 = vmul.f32 %v985, %v1246
        %v1301 = vmul.f32 %v991, %v1248
        %v1302 = vmul.f32 %v995, %v1250
        %v1303 = vmul.f32 %v1001, %v1252
        %v1304 = vmul.f32 %v1005, %v1254
        %v1305 = vmul.f32 %v1011, %v1256
        %v1306 = vmul.f32 %v1015, %v1258
        %v1307 = vmul.f32 %v1021, %v1260
        %v1308 = vmul.f32 %v1025, %v1262
        %v1309 = vmul.f32 %v1031, %v1264
        %v1310 = vmul.f32 %v1035, %v1266
        %v1311 = vmul.f32 %v1041, %v1268
        %v1312 = vmul.f32 %v1045, %v1270
        %v1313 = vmul.f32 %v1051, %v1272
        %v1314 = vmul.f32 %v1055, %v1274
        %v1315 = vmul.f32 %v1061, %v1276
        %v1316 = vmul.f32 %v1065, %v1278
        %v1317 = vmul.f32 %v1071, %v1280
        %v1318 = vmul.f32 %v1075, %v1282
        %v1319 = vmul.f32 %v1081, %v1284
        %v1320 = vmul.f32 %v1085, %v1286
        %v1321 = vmul.f32 %v1091, %v1288
        %v1322 = vmul.f32 %v1095, %v1290
        %v1323 = vpack.c.bf16 %v1292, %v1291
        %v1324 = vpack.c.bf16 %v1294, %v1293
        %v1325 = vpack.c.bf16 %v1296, %v1295
        %v1326 = vpack.c.bf16 %v1298, %v1297
        %v1327 = vpack.c.bf16 %v1300, %v1299
        %v1328 = vpack.c.bf16 %v1302, %v1301
        %v1329 = vpack.c.bf16 %v1304, %v1303
        %v1330 = vpack.c.bf16 %v1306, %v1305
        %v1331 = vpack.c.bf16 %v1308, %v1307
        %v1332 = vpack.c.bf16 %v1310, %v1309
        %v1333 = vpack.c.bf16 %v1312, %v1311
        %v1334 = vpack.c.bf16 %v1314, %v1313
        %v1335 = vpack.c.bf16 %v1316, %v1315
        %v1336 = vpack.c.bf16 %v1318, %v1317
        %v1337 = vpack.c.bf16 %v1320, %v1319
        %v1338 = vpack.c.bf16 %v1322, %v1321
        %s1339 = scalar_lea.vmem [#allocation5], 256
        %v1340 = vld [vmem:[%s1339] sm:$0xff]
        %v1341 = vld [vmem:[%s1339 + $0x8] sm:$0xff]
        %v1342 = vld [vmem:[%s1339 + $0x10] sm:$0xff]
        %v1343 = vld [vmem:[%s1339 + $0x18] sm:$0xff]
        %v1344 = vld [vmem:[%s1339 + $0x20] sm:$0xff]
        %v1345 = vld [vmem:[%s1339 + $0x28] sm:$0xff]
        %v1346 = vld [vmem:[%s1339 + $0x30] sm:$0xff]
        %v1347 = vld [vmem:[%s1339 + $0x38] sm:$0xff]
        %v1348 = vld [vmem:[%s1339 + $0x40] sm:$0xff]
        %v1349 = vld [vmem:[%s1339 + $0x48] sm:$0xff]
        %v1350 = vld [vmem:[%s1339 + $0x50] sm:$0xff]
        %v1351 = vld [vmem:[%s1339 + $0x58] sm:$0xff]
        %v1352 = vld [vmem:[%s1339 + $0x60] sm:$0xff]
        %v1353 = vld [vmem:[%s1339 + $0x68] sm:$0xff]
        %v1354 = vld [vmem:[%s1339 + $0x70] sm:$0xff]
        %v1355 = vld [vmem:[%s1339 + $0x78] sm:$0xff]
        %s1356 = scalar_lea.vmem %s2, 4
        %v1357 = vld [vmem:[%s1356] sm:$0x3]
        %v1359 = vlaneseq
        %v1360 = vshrl.u32 %v1359, 7
        %v1361 = vsub.s32 0, %v1360
        %v1362 = vrot.slane %v1357, %v1361
        %v1363 = vlaneseq
        %v1364 = vshrl.u32 %v1363, 7
        %v1365 = vsub.s32 1, %v1364
        %v1366 = vrot.slane %v1357, %v1365
        %v1385 = vunpack.c.l.b16 %v1340
        %v1386 = vunpack.c.h.b16 %v1340
        %v1387 = vunpack.c.l.b16 %v1341
        %v1388 = vunpack.c.h.b16 %v1341
        %v1389 = vunpack.c.l.b16 %v1342
        %v1390 = vunpack.c.h.b16 %v1342
        %v1391 = vunpack.c.l.b16 %v1343
        %v1392 = vunpack.c.h.b16 %v1343
        %v1393 = vunpack.c.l.b16 %v1344
        %v1394 = vunpack.c.h.b16 %v1344
        %v1395 = vunpack.c.l.b16 %v1345
        %v1396 = vunpack.c.h.b16 %v1345
        %v1397 = vunpack.c.l.b16 %v1346
        %v1398 = vunpack.c.h.b16 %v1346
        %v1399 = vunpack.c.l.b16 %v1347
        %v1400 = vunpack.c.h.b16 %v1347
        %v1401 = vunpack.c.l.b16 %v1348
        %v1402 = vunpack.c.h.b16 %v1348
        %v1403 = vunpack.c.l.b16 %v1349
        %v1404 = vunpack.c.h.b16 %v1349
        %v1405 = vunpack.c.l.b16 %v1350
        %v1406 = vunpack.c.h.b16 %v1350
        %v1407 = vunpack.c.l.b16 %v1351
        %v1408 = vunpack.c.h.b16 %v1351
        %v1409 = vunpack.c.l.b16 %v1352
        %v1410 = vunpack.c.h.b16 %v1352
        %v1411 = vunpack.c.l.b16 %v1353
        %v1412 = vunpack.c.h.b16 %v1353
        %v1413 = vunpack.c.l.b16 %v1354
        %v1414 = vunpack.c.h.b16 %v1354
        %v1415 = vunpack.c.l.b16 %v1355
        %v1416 = vunpack.c.h.b16 %v1355
        %v1417 = vpack.c.b16 %v1387, %v1385
        %v1418 = vpack.c.b16 %v1388, %v1386
        %v1419 = vpack.c.b16 %v1391, %v1389
        %v1420 = vpack.c.b16 %v1392, %v1390
        %v1421 = vpack.c.b16 %v1395, %v1393
        %v1422 = vpack.c.b16 %v1396, %v1394
        %v1423 = vpack.c.b16 %v1399, %v1397
        %v1424 = vpack.c.b16 %v1400, %v1398
        %v1425 = vpack.c.b16 %v1403, %v1401
        %v1426 = vpack.c.b16 %v1404, %v1402
        %v1427 = vpack.c.b16 %v1407, %v1405
        %v1428 = vpack.c.b16 %v1408, %v1406
        %v1429 = vpack.c.b16 %v1411, %v1409
        %v1430 = vpack.c.b16 %v1412, %v1410
        %v1431 = vpack.c.b16 %v1415, %v1413
        %v1432 = vpack.c.b16 %v1416, %v1414
        %1449 = vmatprep.subr.bf16.mxu0 %v1418
        %1450 = vmatpush1.bf16.msra.mxu0 %v1417
        %1451 = vmatprep.subr.bf16.mxu0 %v1420
        %1452 = vmatpush1.bf16.msra.mxu0 %v1419
        %1453 = vmatprep.subr.bf16.mxu0 %v1422
        %1454 = vmatpush1.bf16.msra.mxu0 %v1421
        %1455 = vmatprep.subr.bf16.mxu0 %v1424
        %1456 = vmatpush1.bf16.msra.mxu0 %v1423
        %1457 = vmatprep.subr.bf16.mxu0 %v1426
        %1458 = vmatpush1.bf16.msra.mxu0 %v1425
        %1459 = vmatprep.subr.bf16.mxu0 %v1428
        %1460 = vmatpush1.bf16.msra.mxu0 %v1427
        %1461 = vmatprep.subr.bf16.mxu0 %v1430
        %1462 = vmatpush1.bf16.msra.mxu0 %v1429
        %1463 = vmatprep.subr.bf16.mxu0 %v1432
        %1464 = vmatpush1.bf16.msra.mxu0 %v1431
        %1465 = vmatprep.subr.bf16.mxu0 0
        %1466 = vmatpush1.bf16.msra.mxu0 0
        %1467 = vmatprep.subr.bf16.mxu0 0
        %1468 = vmatpush1.bf16.msra.mxu0 0
        %1469 = vmatprep.subr.bf16.mxu0 0
        %1470 = vmatpush1.bf16.msra.mxu0 0
        %1471 = vmatprep.subr.bf16.mxu0 0
        %1472 = vmatpush1.bf16.msra.mxu0 0
        %1473 = vmatprep.subr.bf16.mxu0 0
        %1474 = vmatpush1.bf16.msra.mxu0 0
        %1475 = vmatprep.subr.bf16.mxu0 0
        %1476 = vmatpush1.bf16.msra.mxu0 0
        %1477 = vmatprep.subr.bf16.mxu0 0
        %1478 = vmatpush1.bf16.msra.mxu0 0
        %1479 = vmatprep.subr.bf16.mxu0 0
        %1480 = vmatpush1.bf16.msra.mxu0 0
        %1481 = vmatprep.mubr.bf16.mxu0 0
        %1482 = vmatmul.mubr.bf16.gmra.mrb[0].mxu0 %v1323
        %v1483 = vpop.f32.mrb[0].mxu0
        %v1484 = vadd.f32 %v1362, %v1483
        %v1485 = vpop.f32.mrb[0].mxu0
        %v1486 = vadd.f32 %v1366, %v1485
        %v1487 = vpop.f32.mrb[0].mxu0
        %v1488 = vadd.f32 %v1362, %v1487
        %v1489 = vpop.f32.mrb[0].mxu0
        %v1490 = vadd.f32 %v1366, %v1489
        %1491 = vmatprep.mubr.bf16.mxu0 0
        %1492 = vmatmul.mubr.bf16.gmra.mrb[0].mxu0 %v1324
        %v1493 = vpop.f32.mrb[0].mxu0
        %v1494 = vadd.f32 %v1362, %v1493
        %v1495 = vpop.f32.mrb[0].mxu0
        %v1496 = vadd.f32 %v1366, %v1495
        %v1497 = vpop.f32.mrb[0].mxu0
        %v1498 = vadd.f32 %v1362, %v1497
        %v1499 = vpop.f32.mrb[0].mxu0
        %v1500 = vadd.f32 %v1366, %v1499
        %1501 = vmatprep.mubr.bf16.mxu0 0
        %1502 = vmatmul.mubr.bf16.gmra.mrb[0].mxu0 %v1325
        %v1503 = vpop.f32.mrb[0].mxu0
        %v1504 = vadd.f32 %v1362, %v1503
        %v1505 = vpop.f32.mrb[0].mxu0
        %v1506 = vadd.f32 %v1366, %v1505
        %v1507 = vpop.f32.mrb[0].mxu0
        %v1508 = vadd.f32 %v1362, %v1507
        %v1509 = vpop.f32.mrb[0].mxu0
        %v1510 = vadd.f32 %v1366, %v1509
        %1511 = vmatprep.mubr.bf16.mxu0 0
        %1512 = vmatmul.mubr.bf16.gmra.mrb[0].mxu0 %v1326
        %v1513 = vpop.f32.mrb[0].mxu0
        %v1514 = vadd.f32 %v1362, %v1513
        %v1515 = vpop.f32.mrb[0].mxu0
        %v1516 = vadd.f32 %v1366, %v1515
        %v1517 = vpop.f32.mrb[0].mxu0
        %v1518 = vadd.f32 %v1362, %v1517
        %v1519 = vpop.f32.mrb[0].mxu0
        %v1520 = vadd.f32 %v1366, %v1519
        %1521 = vmatprep.mubr.bf16.mxu0 0
        %1522 = vmatmul.mubr.bf16.gmra.mrb[0].mxu0 %v1327
        %v1523 = vpop.f32.mrb[0].mxu0
        %v1524 = vadd.f32 %v1362, %v1523
        %v1525 = vpop.f32.mrb[0].mxu0
        %v1526 = vadd.f32 %v1366, %v1525
        %v1527 = vpop.f32.mrb[0].mxu0
        %v1528 = vadd.f32 %v1362, %v1527
        %v1529 = vpop.f32.mrb[0].mxu0
        %v1530 = vadd.f32 %v1366, %v1529
        %1531 = vmatprep.mubr.bf16.mxu0 0
        %1532 = vmatmul.mubr.bf16.gmra.mrb[0].mxu0 %v1328
        %v1533 = vpop.f32.mrb[0].mxu0
        %v1534 = vadd.f32 %v1362, %v1533
        %v1535 = vpop.f32.mrb[0].mxu0
        %v1536 = vadd.f32 %v1366, %v1535
        %v1537 = vpop.f32.mrb[0].mxu0
        %v1538 = vadd.f32 %v1362, %v1537
        %v1539 = vpop.f32.mrb[0].mxu0
        %v1540 = vadd.f32 %v1366, %v1539
        %1541 = vmatprep.mubr.bf16.mxu0 0
        %1542 = vmatmul.mubr.bf16.gmra.mrb[0].mxu0 %v1329
        %v1543 = vpop.f32.mrb[0].mxu0
        %v1544 = vadd.f32 %v1362, %v1543
        %v1545 = vpop.f32.mrb[0].mxu0
        %v1546 = vadd.f32 %v1366, %v1545
        %v1547 = vpop.f32.mrb[0].mxu0
        %v1548 = vadd.f32 %v1362, %v1547
        %v1549 = vpop.f32.mrb[0].mxu0
        %v1550 = vadd.f32 %v1366, %v1549
        %1551 = vmatprep.mubr.bf16.mxu0 0
        %1552 = vmatmul.mubr.bf16.gmra.mrb[0].mxu0 %v1330
        %v1553 = vpop.f32.mrb[0].mxu0
        %v1554 = vadd.f32 %v1362, %v1553
        %v1555 = vpop.f32.mrb[0].mxu0
        %v1556 = vadd.f32 %v1366, %v1555
        %v1557 = vpop.f32.mrb[0].mxu0
        %v1558 = vadd.f32 %v1362, %v1557
        %v1559 = vpop.f32.mrb[0].mxu0
        %v1560 = vadd.f32 %v1366, %v1559
        %1561 = vmatprep.mubr.bf16.mxu0 0
        %1562 = vmatmul.mubr.bf16.gmra.mrb[0].mxu0 %v1331
        %v1563 = vpop.f32.mrb[0].mxu0
        %v1564 = vadd.f32 %v1362, %v1563
        %v1565 = vpop.f32.mrb[0].mxu0
        %v1566 = vadd.f32 %v1366, %v1565
        %v1567 = vpop.f32.mrb[0].mxu0
        %v1568 = vadd.f32 %v1362, %v1567
        %v1569 = vpop.f32.mrb[0].mxu0
        %v1570 = vadd.f32 %v1366, %v1569
        %1571 = vmatprep.mubr.bf16.mxu0 0
        %1572 = vmatmul.mubr.bf16.gmra.mrb[0].mxu0 %v1332
        %v1573 = vpop.f32.mrb[0].mxu0
        %v1574 = vadd.f32 %v1362, %v1573
        %v1575 = vpop.f32.mrb[0].mxu0
        %v1576 = vadd.f32 %v1366, %v1575
        %v1577 = vpop.f32.mrb[0].mxu0
        %v1578 = vadd.f32 %v1362, %v1577
        %v1579 = vpop.f32.mrb[0].mxu0
        %v1580 = vadd.f32 %v1366, %v1579
        %1581 = vmatprep.mubr.bf16.mxu0 0
        %1582 = vmatmul.mubr.bf16.gmra.mrb[0].mxu0 %v1333
        %v1583 = vpop.f32.mrb[0].mxu0
        %v1584 = vadd.f32 %v1362, %v1583
        %v1585 = vpop.f32.mrb[0].mxu0
        %v1586 = vadd.f32 %v1366, %v1585
        %v1587 = vpop.f32.mrb[0].mxu0
        %v1588 = vadd.f32 %v1362, %v1587
        %v1589 = vpop.f32.mrb[0].mxu0
        %v1590 = vadd.f32 %v1366, %v1589
        %1591 = vmatprep.mubr.bf16.mxu0 0
        %1592 = vmatmul.mubr.bf16.gmra.mrb[0].mxu0 %v1334
        %v1593 = vpop.f32.mrb[0].mxu0
        %v1594 = vadd.f32 %v1362, %v1593
        %v1595 = vpop.f32.mrb[0].mxu0
        %v1596 = vadd.f32 %v1366, %v1595
        %v1597 = vpop.f32.mrb[0].mxu0
        %v1598 = vadd.f32 %v1362, %v1597
        %v1599 = vpop.f32.mrb[0].mxu0
        %v1600 = vadd.f32 %v1366, %v1599
        %1601 = vmatprep.mubr.bf16.mxu0 0
        %1602 = vmatmul.mubr.bf16.gmra.mrb[0].mxu0 %v1335
        %v1603 = vpop.f32.mrb[0].mxu0
        %v1604 = vadd.f32 %v1362, %v1603
        %v1605 = vpop.f32.mrb[0].mxu0
        %v1606 = vadd.f32 %v1366, %v1605
        %v1607 = vpop.f32.mrb[0].mxu0
        %v1608 = vadd.f32 %v1362, %v1607
        %v1609 = vpop.f32.mrb[0].mxu0
        %v1610 = vadd.f32 %v1366, %v1609
        %1611 = vmatprep.mubr.bf16.mxu0 0
        %1612 = vmatmul.mubr.bf16.gmra.mrb[0].mxu0 %v1336
        %v1613 = vpop.f32.mrb[0].mxu0
        %v1614 = vadd.f32 %v1362, %v1613
        %v1615 = vpop.f32.mrb[0].mxu0
        %v1616 = vadd.f32 %v1366, %v1615
        %v1617 = vpop.f32.mrb[0].mxu0
        %v1618 = vadd.f32 %v1362, %v1617
        %v1619 = vpop.f32.mrb[0].mxu0
        %v1620 = vadd.f32 %v1366, %v1619
        %1621 = vmatprep.mubr.bf16.mxu0 0
        %1622 = vmatmul.mubr.bf16.gmra.mrb[0].mxu0 %v1337
        %v1623 = vpop.f32.mrb[0].mxu0
        %v1624 = vadd.f32 %v1362, %v1623
        %v1625 = vpop.f32.mrb[0].mxu0
        %v1626 = vadd.f32 %v1366, %v1625
        %v1627 = vpop.f32.mrb[0].mxu0
        %v1628 = vadd.f32 %v1362, %v1627
        %v1629 = vpop.f32.mrb[0].mxu0
        %v1630 = vadd.f32 %v1366, %v1629
        %1631 = vmatprep.mubr.bf16.mxu0 0
        %1632 = vmatmul.mubr.bf16.gmra.mrb[0].mxu0 %v1338
        %v1633 = vpop.f32.mrb[0].mxu0
        %v1634 = vadd.f32 %v1362, %v1633
        %v1635 = vpop.f32.mrb[0].mxu0
        %v1636 = vadd.f32 %v1366, %v1635
        %v1637 = vpop.f32.mrb[0].mxu0
        %v1638 = vadd.f32 %v1362, %v1637
        %v1639 = vpop.f32.mrb[0].mxu0
        %v1640 = vadd.f32 %v1366, %v1639
        %1641 = vdwg.mxu0
        %v1642 = vsub.f32 0.0, %v1486
        %v1643 = vsub.f32 0.0, %v1490
        %v1644 = vsub.f32 0.0, %v1496
        %v1645 = vsub.f32 0.0, %v1500
        %v1646 = vsub.f32 0.0, %v1506
        %v1647 = vsub.f32 0.0, %v1510
        %v1648 = vsub.f32 0.0, %v1516
        %v1649 = vsub.f32 0.0, %v1520
        %v1650 = vsub.f32 0.0, %v1526
        %v1651 = vsub.f32 0.0, %v1530
        %v1652 = vsub.f32 0.0, %v1536
        %v1653 = vsub.f32 0.0, %v1540
        %v1654 = vsub.f32 0.0, %v1546
        %v1655 = vsub.f32 0.0, %v1550
        %v1656 = vsub.f32 0.0, %v1556
        %v1657 = vsub.f32 0.0, %v1560
        %v1658 = vsub.f32 0.0, %v1566
        %v1659 = vsub.f32 0.0, %v1570
        %v1660 = vsub.f32 0.0, %v1576
        %v1661 = vsub.f32 0.0, %v1580
        %v1662 = vsub.f32 0.0, %v1586
        %v1663 = vsub.f32 0.0, %v1590
        %v1664 = vsub.f32 0.0, %v1596
        %v1665 = vsub.f32 0.0, %v1600
        %v1666 = vsub.f32 0.0, %v1606
        %v1667 = vsub.f32 0.0, %v1610
        %v1668 = vsub.f32 0.0, %v1616
        %v1669 = vsub.f32 0.0, %v1620
        %v1670 = vsub.f32 0.0, %v1626
        %v1671 = vsub.f32 0.0, %v1630
        %v1672 = vsub.f32 0.0, %v1636
        %v1673 = vsub.f32 0.0, %v1640
        %v1674 = vmul.f32 %v1642, 1.442695
        %v1675 = vpow.pop %v1674
        %v1676 = vmul.f32 %v1643, 1.442695
        %v1677 = vpow.pop %v1676
        %v1678 = vmul.f32 %v1644, 1.442695
        %v1679 = vpow.pop %v1678
        %v1680 = vmul.f32 %v1645, 1.442695
        %v1681 = vpow.pop %v1680
        %v1682 = vmul.f32 %v1646, 1.442695
        %v1683 = vpow.pop %v1682
        %v1684 = vmul.f32 %v1647, 1.442695
        %v1685 = vpow.pop %v1684
        %v1686 = vmul.f32 %v1648, 1.442695
        %v1687 = vpow.pop %v1686
        %v1688 = vmul.f32 %v1649, 1.442695
        %v1689 = vpow.pop %v1688
        %v1690 = vmul.f32 %v1650, 1.442695
        %v1691 = vpow.pop %v1690
        %v1692 = vmul.f32 %v1651, 1.442695
        %v1693 = vpow.pop %v1692
        %v1694 = vmul.f32 %v1652, 1.442695
        %v1695 = vpow.pop %v1694
        %v1696 = vmul.f32 %v1653, 1.442695
        %v1697 = vpow.pop %v1696
        %v1698 = vmul.f32 %v1654, 1.442695
        %v1699 = vpow.pop %v1698
        %v1700 = vmul.f32 %v1655, 1.442695
        %v1701 = vpow.pop %v1700
        %v1702 = vmul.f32 %v1656, 1.442695
        %v1703 = vpow.pop %v1702
        %v1704 = vmul.f32 %v1657, 1.442695
        %v1705 = vpow.pop %v1704
        %v1706 = vmul.f32 %v1658, 1.442695
        %v1707 = vpow.pop %v1706
        %v1708 = vmul.f32 %v1659, 1.442695
        %v1709 = vpow.pop %v1708
        %v1710 = vmul.f32 %v1660, 1.442695
        %v1711 = vpow.pop %v1710
        %v1712 = vmul.f32 %v1661, 1.442695
        %v1713 = vpow.pop %v1712
        %v1714 = vmul.f32 %v1662, 1.442695
        %v1715 = vpow.pop %v1714
        %v1716 = vmul.f32 %v1663, 1.442695
        %v1717 = vpow.pop %v1716
        %v1718 = vmul.f32 %v1664, 1.442695
        %v1719 = vpow.pop %v1718
        %v1720 = vmul.f32 %v1665, 1.442695
        %v1721 = vpow.pop %v1720
        %v1722 = vmul.f32 %v1666, 1.442695
        %v1723 = vpow.pop %v1722
        %v1724 = vmul.f32 %v1667, 1.442695
        %v1725 = vpow.pop %v1724
        %v1726 = vmul.f32 %v1668, 1.442695
        %v1727 = vpow.pop %v1726
        %v1728 = vmul.f32 %v1669, 1.442695
        %v1729 = vpow.pop %v1728
        %v1730 = vmul.f32 %v1670, 1.442695
        %v1731 = vpow.pop %v1730
        %v1732 = vmul.f32 %v1671, 1.442695
        %v1733 = vpow.pop %v1732
        %v1734 = vmul.f32 %v1672, 1.442695
        %v1735 = vpow.pop %v1734
        %v1736 = vmul.f32 %v1673, 1.442695
        %v1737 = vpow.pop %v1736
        %v1738 = vadd.f32 %v1675, 1.0
        %v1739 = vadd.f32 %v1677, 1.0
        %v1740 = vadd.f32 %v1679, 1.0
        %v1741 = vadd.f32 %v1681, 1.0
        %v1742 = vadd.f32 %v1683, 1.0
        %v1743 = vadd.f32 %v1685, 1.0
        %v1744 = vadd.f32 %v1687, 1.0
        %v1745 = vadd.f32 %v1689, 1.0
        %v1746 = vadd.f32 %v1691, 1.0
        %v1747 = vadd.f32 %v1693, 1.0
        %v1748 = vadd.f32 %v1695, 1.0
        %v1749 = vadd.f32 %v1697, 1.0
        %v1750 = vadd.f32 %v1699, 1.0
        %v1751 = vadd.f32 %v1701, 1.0
        %v1752 = vadd.f32 %v1703, 1.0
        %v1753 = vadd.f32 %v1705, 1.0
        %v1754 = vadd.f32 %v1707, 1.0
        %v1755 = vadd.f32 %v1709, 1.0
        %v1756 = vadd.f32 %v1711, 1.0
        %v1757 = vadd.f32 %v1713, 1.0
        %v1758 = vadd.f32 %v1715, 1.0
        %v1759 = vadd.f32 %v1717, 1.0
        %v1760 = vadd.f32 %v1719, 1.0
        %v1761 = vadd.f32 %v1721, 1.0
        %v1762 = vadd.f32 %v1723, 1.0
        %v1763 = vadd.f32 %v1725, 1.0
        %v1764 = vadd.f32 %v1727, 1.0
        %v1765 = vadd.f32 %v1729, 1.0
        %v1766 = vadd.f32 %v1731, 1.0
        %v1767 = vadd.f32 %v1733, 1.0
        %v1768 = vadd.f32 %v1735, 1.0
        %v1769 = vadd.f32 %v1737, 1.0
        %v1770 = vrcp.pop %v1738
        %v1771 = vmul.f32 1.0, %v1770
        %v1772 = vrcp.pop %v1739
        %v1773 = vmul.f32 1.0, %v1772
        %v1774 = vrcp.pop %v1740
        %v1775 = vmul.f32 1.0, %v1774
        %v1776 = vrcp.pop %v1741
        %v1777 = vmul.f32 1.0, %v1776
        %v1778 = vrcp.pop %v1742
        %v1779 = vmul.f32 1.0, %v1778
        %v1780 = vrcp.pop %v1743
        %v1781 = vmul.f32 1.0, %v1780
        %v1782 = vrcp.pop %v1744
        %v1783 = vmul.f32 1.0, %v1782
        %v1784 = vrcp.pop %v1745
        %v1785 = vmul.f32 1.0, %v1784
        %v1786 = vrcp.pop %v1746
        %v1787 = vmul.f32 1.0, %v1786
        %v1788 = vrcp.pop %v1747
        %v1789 = vmul.f32 1.0, %v1788
        %v1790 = vrcp.pop %v1748
        %v1791 = vmul.f32 1.0, %v1790
        %v1792 = vrcp.pop %v1749
        %v1793 = vmul.f32 1.0, %v1792
        %v1794 = vrcp.pop %v1750
        %v1795 = vmul.f32 1.0, %v1794
        %v1796 = vrcp.pop %v1751
        %v1797 = vmul.f32 1.0, %v1796
        %v1798 = vrcp.pop %v1752
        %v1799 = vmul.f32 1.0, %v1798
        %v1800 = vrcp.pop %v1753
        %v1801 = vmul.f32 1.0, %v1800
        %v1802 = vrcp.pop %v1754
        %v1803 = vmul.f32 1.0, %v1802
        %v1804 = vrcp.pop %v1755
        %v1805 = vmul.f32 1.0, %v1804
        %v1806 = vrcp.pop %v1756
        %v1807 = vmul.f32 1.0, %v1806
        %v1808 = vrcp.pop %v1757
        %v1809 = vmul.f32 1.0, %v1808
        %v1810 = vrcp.pop %v1758
        %v1811 = vmul.f32 1.0, %v1810
        %v1812 = vrcp.pop %v1759
        %v1813 = vmul.f32 1.0, %v1812
        %v1814 = vrcp.pop %v1760
        %v1815 = vmul.f32 1.0, %v1814
        %v1816 = vrcp.pop %v1761
        %v1817 = vmul.f32 1.0, %v1816
        %v1818 = vrcp.pop %v1762
        %v1819 = vmul.f32 1.0, %v1818
        %v1820 = vrcp.pop %v1763
        %v1821 = vmul.f32 1.0, %v1820
        %v1822 = vrcp.pop %v1764
        %v1823 = vmul.f32 1.0, %v1822
        %v1824 = vrcp.pop %v1765
        %v1825 = vmul.f32 1.0, %v1824
        %v1826 = vrcp.pop %v1766
        %v1827 = vmul.f32 1.0, %v1826
        %v1828 = vrcp.pop %v1767
        %v1829 = vmul.f32 1.0, %v1828
        %v1830 = vrcp.pop %v1768
        %v1831 = vmul.f32 1.0, %v1830
        %v1832 = vrcp.pop %v1769
        %v1833 = vmul.f32 1.0, %v1832
        %v1834 = vmul.f32 %v1484, %v1771
        %v1835 = vmul.f32 %v1488, %v1773
        %v1836 = vmul.f32 %v1494, %v1775
        %v1837 = vmul.f32 %v1498, %v1777
        %v1838 = vmul.f32 %v1504, %v1779
        %v1839 = vmul.f32 %v1508, %v1781
        %v1840 = vmul.f32 %v1514, %v1783
        %v1841 = vmul.f32 %v1518, %v1785
        %v1842 = vmul.f32 %v1524, %v1787
        %v1843 = vmul.f32 %v1528, %v1789
        %v1844 = vmul.f32 %v1534, %v1791
        %v1845 = vmul.f32 %v1538, %v1793
        %v1846 = vmul.f32 %v1544, %v1795
        %v1847 = vmul.f32 %v1548, %v1797
        %v1848 = vmul.f32 %v1554, %v1799
        %v1849 = vmul.f32 %v1558, %v1801
        %v1850 = vmul.f32 %v1564, %v1803
        %v1851 = vmul.f32 %v1568, %v1805
        %v1852 = vmul.f32 %v1574, %v1807
        %v1853 = vmul.f32 %v1578, %v1809
        %v1854 = vmul.f32 %v1584, %v1811
        %v1855 = vmul.f32 %v1588, %v1813
        %v1856 = vmul.f32 %v1594, %v1815
        %v1857 = vmul.f32 %v1598, %v1817
        %v1858 = vmul.f32 %v1604, %v1819
        %v1859 = vmul.f32 %v1608, %v1821
        %v1860 = vmul.f32 %v1614, %v1823
        %v1861 = vmul.f32 %v1618, %v1825
        %v1862 = vmul.f32 %v1624, %v1827
        %v1863 = vmul.f32 %v1628, %v1829
        %v1864 = vmul.f32 %v1634, %v1831
        %v1865 = vmul.f32 %v1638, %v1833
        %1866 = vst [vmem:[%s203] sm:$0xff] %v1834
        %1867 = vst [vmem:[%s203 + $0x8] sm:$0xff] %v1835
        %1868 = vst [vmem:[%s203 + $0x10] sm:$0xff] %v1836
        %1869 = vst [vmem:[%s203 + $0x18] sm:$0xff] %v1837
        %1870 = vst [vmem:[%s203 + $0x20] sm:$0xff] %v1838
        %1871 = vst [vmem:[%s203 + $0x28] sm:$0xff] %v1839
        %1872 = vst [vmem:[%s203 + $0x30] sm:$0xff] %v1840
        %1873 = vst [vmem:[%s203 + $0x38] sm:$0xff] %v1841
        %1874 = vst [vmem:[%s203 + $0x40] sm:$0xff] %v1842
        %1875 = vst [vmem:[%s203 + $0x48] sm:$0xff] %v1843
        %1876 = vst [vmem:[%s203 + $0x50] sm:$0xff] %v1844
        %1877 = vst [vmem:[%s203 + $0x58] sm:$0xff] %v1845
        %1878 = vst [vmem:[%s203 + $0x60] sm:$0xff] %v1846
        %1879 = vst [vmem:[%s203 + $0x68] sm:$0xff] %v1847
        %1880 = vst [vmem:[%s203 + $0x70] sm:$0xff] %v1848
        %1881 = vst [vmem:[%s203 + $0x78] sm:$0xff] %v1849
        %1882 = vst [vmem:[%s203 + $0x80] sm:$0xff] %v1850
        %1883 = vst [vmem:[%s203 + $0x88] sm:$0xff] %v1851
        %1884 = vst [vmem:[%s203 + $0x90] sm:$0xff] %v1852
        %1885 = vst [vmem:[%s203 + $0x98] sm:$0xff] %v1853
        %1886 = vst [vmem:[%s203 + $0xa0] sm:$0xff] %v1854
        %1887 = vst [vmem:[%s203 + $0xa8] sm:$0xff] %v1855
        %1888 = vst [vmem:[%s203 + $0xb0] sm:$0xff] %v1856
        %1889 = vst [vmem:[%s203 + $0xb8] sm:$0xff] %v1857
        %1890 = vst [vmem:[%s203 + $0xc0] sm:$0xff] %v1858
        %1891 = vst [vmem:[%s203 + $0xc8] sm:$0xff] %v1859
        %1892 = vst [vmem:[%s203 + $0xd0] sm:$0xff] %v1860
        %1893 = vst [vmem:[%s203 + $0xd8] sm:$0xff] %v1861
        %1894 = vst [vmem:[%s203 + $0xe0] sm:$0xff] %v1862
        %1895 = vst [vmem:[%s203 + $0xe8] sm:$0xff] %v1863
        %1896 = vst [vmem:[%s203 + $0xf0] sm:$0xff] %v1864
        %1897 = vst [vmem:[%s203 + $0xf8] sm:$0xff] %v1865
        %s1898 = sand.u32 %s97, 1
        %s1899 = scalar_lea.sflag [#allocation4], %s1898
        %s1900 = sand.u32 %s97, 1
        %s1901 = smul.addr %s1900, 256
        %s1902 = scalar_lea.vmem [#allocation7], %s1901
        // Predicated region
        $region41: #{tpu_custom_call.1} parent=31 // pred_check
          %p1903 = pneg %p107
        $region42: #{tpu_custom_call.1} parent=31 // pred_check_branch
          %1905 = sbr.rel (%p1903) target = $region44
        $region43: #{tpu_custom_call.1} parent=31 // pred_region
          %s1906 = smul.u32 32, %s21
          %s1908 = ssub.s32 4096, 4096
          %1909 = vsyncadd %s1899, %s1908
          %s1910 = smul.addr %s1906, 128
          %s1911 = scalar_lea.hbm %s3, %s1910
          %s1912 = sshll.u32 %s1902, 4
          %s1913 = int_to_ptr.vmem [resolvable:$true] %s1912
          %1918 = dma.vmem_to_hbm [thread:$0]  %s1913, 4096, %s1911, %s1899, 128, 128, 8
        $region44: #{tpu_custom_call.1} parent=31 // pred_fallthru
          _
      $region32: #{tpu_custom_call.1} parent=5 // pred_fallthru
        _
      %p1919 = scmp.le.s32.totalorder 2, %s16
      // Predicated region
      $region45: #{tpu_custom_call.1} parent=5 // pred_check
        %p1920 = pneg %p1919
      $region46: #{tpu_custom_call.1} parent=5 // pred_check_branch
        %1922 = sbr.rel (%p1920) target = $region48
      $region47: #{tpu_custom_call.1} parent=5 // pred_region
        %s1923 = ssub.s32 %s16, 2
        // Predicated region
        $region49: #{tpu_custom_call.1} parent=47 // pred_check
          %p1924 = pneg %p113
        $region50: #{tpu_custom_call.1} parent=47 // pred_check_branch
          %1926 = sbr.rel (%p1924) target = $region52
        $region51: #{tpu_custom_call.1} parent=47 // pred_region
          %s1927 = sand.u32 %s98, 1
          %s1928 = scalar_lea.sflag [#allocation4], %s1927
          %s1929 = sand.u32 %s98, 1
          %s1930 = smul.addr %s1929, 256
          %s1931 = scalar_lea.vmem [#allocation7], %s1930
          %1932 = dma.done %s1928, 4096
        $region52: #{tpu_custom_call.1} parent=47 // pred_fallthru
          _
      $region48: #{tpu_custom_call.1} parent=5 // pred_fallthru
        _
    $region6: #{tpu_custom_call.1} parent=1 // loop_footer
      %s20 = sadd.s32 1, %s16
    $region7: #{tpu_custom_call.1} parent=1 // loop_footer_branch
      %15 = sbr.rel target = $region3
    $region8: #{tpu_custom_call.1} parent=1 // loop_exit
      _
    %1933 = vsyncpa [#allocation3], 1
    %s1934 = scalar_lea.sflag [#allocation3], 1
    %1935 = vsyncpa %s1934, 1
    %1936 = vsyncpa [#allocation6], 1
    %1937 = vsyncpa [#allocation4], 1
    %s1938 = scalar_lea.sflag [#allocation4], 1
    %1939 = vsyncpa %s1938, 1

</llo_original>
